<compile_context>
chip_gen: v5e
topology: v5e:2x2
jax: 0.10.0
libtpu: 0.0.40
codegen_flags: <defaults>
</compile_context>

<pallas_src>
import jax
import jax.numpy as jnp
from jax.experimental import pallas as pl
from jax.experimental.pallas import tpu as pltpu


# ------------------------------ fused kernel --------------------------------

def _bottleneck_kernel(x_ref, w1_ref, b1_ref, w2_ref, b2_ref, w3_ref, b3_ref,
                       o_ref, p_ref):
    """Fused bottleneck for one batch element.

    x_ref : (1, H, W, Cin)  f32   NHWC input tile (also the residual)
    w1_ref: (Cin, P)        bf16  1x1 conv1 weight, BN1 scale folded in
    b1_ref: (1, P)          f32   folded BN1 bias
    w2_ref: (9, P, P)       bf16  3x3 conv2 weights (tap = ky*3+kx), BN2 folded
    b2_ref: (1, P)          f32   folded BN2 bias
    w3_ref: (P, C4)         bf16  1x1 conv3 weight, BN3 scale folded in
    b3_ref: (1, C4)         f32   folded BN3 bias
    o_ref : (1, H, W, C4)   f32   output tile
    p_ref : (H+2, W+2, P)   f32   VMEM scratch: zero-padded conv1 output
    """
    _, H, W, Cin = x_ref.shape
    P = w1_ref.shape[1]
    C4 = w3_ref.shape[1]

    # Residual / conv1 input, flattened to (rows, channels). Channels on lanes.
    x2d = x_ref[0].reshape(H * W, Cin)

    # ---- conv1 (1x1) + BN1 + ReLU  ->  (H*W, P) -----------------------------
    y1 = jnp.dot(x2d.astype(jnp.bfloat16), w1_ref[...],
                 preferred_element_type=jnp.float32)
    y1 = jnp.maximum(y1 + b1_ref[...], 0.0)

    # ---- in-kernel zero padding for the 3x3 conv (no host jnp.pad) ----------
    # Dense vreg fill (cheap) + interior overwrite; the halo ring stays zero.
    p_ref[...] = jnp.zeros_like(p_ref)
    p_ref[1:H + 1, 1:W + 1, :] = y1.reshape(H, W, P)

    # ---- conv2 (3x3, pad=1) + BN2 + ReLU  ->  (H*W, P) ----------------------
    # Accumulator is seeded with the folded bias (saves a zero-fill + add).
    acc2 = jnp.broadcast_to(b2_ref[...], (H * W, P)).astype(jnp.float32)
    for ky in range(3):
        for kx in range(3):
            win = p_ref[ky:ky + H, kx:kx + W, :].reshape(H * W, P)
            acc2 = acc2 + jnp.dot(win.astype(jnp.bfloat16),
                                  w2_ref[ky * 3 + kx],
                                  preferred_element_type=jnp.float32)
    y2 = jnp.maximum(acc2, 0.0)

    # ---- conv3 (1x1) + BN3 + residual add + ReLU  ->  (H*W, C4) -------------
    y3 = jnp.dot(y2.astype(jnp.bfloat16), w3_ref[...],
                 preferred_element_type=jnp.float32)
    y3 = y3 + (x2d + b3_ref[...])
    o_ref[0] = jnp.maximum(y3, 0.0).reshape(H, W, C4)


# ------------------------------ host wrapper ---------------------------------

def _fold_bn(gamma, beta, mean, var, eps=1e-5):
    s = gamma / jnp.sqrt(var + eps)          # per-channel scale
    return s, beta - mean * s                # (scale, bias)


def bottleneck_forward(x_nchw, w1_t, bn1, w2_t, bn2, w3_t, bn3):
    """Bottleneck with stride=1, downsample=None (inference-mode BN)."""
    B, Cin, H, W = x_nchw.shape
    P = w1_t.shape[0]                         # planes
    C4 = w3_t.shape[0]                        # planes * expansion
    assert Cin == C4 == 4 * P, "residual add requires inplanes == planes*4"

    # NCHW -> NHWC so channels sit on the 128-wide lanes.
    x_nhwc = jnp.transpose(x_nchw, (0, 2, 3, 1))

    s1, b1 = _fold_bn(*bn1)
    s2, b2 = _fold_bn(*bn2)
    s3, b3 = _fold_bn(*bn3)

    # Fold BN scale into the conv output channels; cast weights to bf16 (MXU),
    # accumulation stays f32 inside the kernel.
    w1 = (jnp.transpose(w1_t[:, :, 0, 0], (1, 0)) * s1).astype(jnp.bfloat16)        # (Cin, P)
    w2 = (jnp.transpose(w2_t, (2, 3, 1, 0)).reshape(9, P, P) * s2).astype(jnp.bfloat16)
    w3 = (jnp.transpose(w3_t[:, :, 0, 0], (1, 0)) * s3).astype(jnp.bfloat16)        # (P, C4)
    b1 = b1.reshape(1, P).astype(jnp.float32)
    b2 = b2.reshape(1, P).astype(jnp.float32)
    b3 = b3.reshape(1, C4).astype(jnp.float32)

    flops = 2 * B * H * W * (Cin * P + 9 * P * P + P * C4)
    bytes_accessed = (B * H * W * (Cin + C4) * 4
                      + (w1.size + w2.size + w3.size) * 2
                      + (2 * P + C4) * 4)

    out_nhwc = pl.pallas_call(
        _bottleneck_kernel,
        out_shape=jax.ShapeDtypeStruct((B, H, W, C4), jnp.float32),
        grid=(B,),
        in_specs=[
            pl.BlockSpec((1, H, W, Cin), lambda b: (b, 0, 0, 0)),   # x (per-batch)
            pl.BlockSpec((Cin, P), lambda b: (0, 0)),               # w1
            pl.BlockSpec((1, P), lambda b: (0, 0)),                 # b1
            pl.BlockSpec((9, P, P), lambda b: (0, 0, 0)),           # w2
            pl.BlockSpec((1, P), lambda b: (0, 0)),                 # b2
            pl.BlockSpec((P, C4), lambda b: (0, 0)),                # w3
            pl.BlockSpec((1, C4), lambda b: (0, 0)),                # b3
        ],
        out_specs=pl.BlockSpec((1, H, W, C4), lambda b: (b, 0, 0, 0)),
        scratch_shapes=[pltpu.VMEM((H + 2, W + 2, P), jnp.float32)],
        compiler_params=pltpu.CompilerParams(
            dimension_semantics=("parallel",),
            vmem_limit_bytes=48 * 1024 * 1024),
        cost_estimate=pl.CostEstimate(flops=flops, transcendentals=0,
                                      bytes_accessed=bytes_accessed),
    )(x_nhwc, w1, b1, w2, b2, w3, b3)

    return jnp.transpose(out_nhwc, (0, 3, 1, 2))                    # back to NCHW


# ------------------------------ pure-JAX reference ---------------------------

def bottleneck_reference(x_nchw, w1_t, bn1, w2_t, bn2, w3_t, bn3):
    def conv(x, w, pad):
        return jax.lax.conv_general_dilated(
            x, w, window_strides=(1, 1), padding=[(pad, pad), (pad, pad)],
            dimension_numbers=('NCHW', 'OIHW', 'NCHW'))

    def bn(x, params, eps=1e-5):
        g, b, m, v = params
        s = g / jnp.sqrt(v + eps)
        return x * s[None, :, None, None] + (b - m * s)[None, :, None, None]

    out = jax.nn.relu(bn(conv(x_nchw, w1_t, 0), bn1))
    out = jax.nn.relu(bn(conv(out, w2_t, 1), bn2))
    out = bn(conv(out, w3_t, 0), bn3)
    return jax.nn.relu(out + x_nchw)


# ----------------------------------- main -------------------------------------

if __name__ == "__main__":
    key = jax.random.PRNGKey(0)
    ks = jax.random.split(key, 8)

    planes = 4
    inplanes = planes * 4             # downsample=None path requires this
    B, H, W = 2, 16, 16

    x = jax.random.normal(ks[0], (B, inplanes, H, W), jnp.float32)

    w1_t = 0.1 * jax.random.normal(ks[1], (planes, inplanes, 1, 1), jnp.float32)
    w2_t = 0.1 * jax.random.normal(ks[2], (planes, planes, 3, 3), jnp.float32)
    w3_t = 0.1 * jax.random.normal(ks[3], (planes * 4, planes, 1, 1), jnp.float32)

    def make_bn(k, c):
        k1, k2, k3, k4 = jax.random.split(k, 4)
        gamma = 1.0 + 0.1 * jax.random.normal(k1, (c,), jnp.float32)
        beta = 0.1 * jax.random.normal(k2, (c,), jnp.float32)
        mean = 0.1 * jax.random.normal(k3, (c,), jnp.float32)
        var = jnp.abs(jax.random.normal(k4, (c,), jnp.float32)) + 0.5
        return (gamma, beta, mean, var)

    bn1 = make_bn(ks[4], planes)
    bn2 = make_bn(ks[5], planes)
    bn3 = make_bn(ks[6], planes * 4)

    fwd = jax.jit(bottleneck_forward)
    out = jax.block_until_ready(fwd(x, w1_t, bn1, w2_t, bn2, w3_t, bn3))

    ref = jax.block_until_ready(
        bottleneck_reference(x, w1_t, bn1, w2_t, bn2, w3_t, bn3))

    assert out.shape == (B, planes * 4, H, W)
    assert bool(jnp.all(jnp.isfinite(out)))
    assert bool(jnp.allclose(out, ref, rtol=5e-2, atol=5e-2)), "mismatch vs reference"

    print("KERNEL_OK")
</pallas_src>

<mosaic_0001>
module attributes {stable_mosaic.version = 11 : i64} {
  func.func @_bottleneck_kernel(%arg0: i32, %arg1: memref<1x16x16x16xf32, #tpu.memory_space<vmem>>, %arg2: memref<16x4xbf16, #tpu.memory_space<vmem>>, %arg3: memref<1x4xf32, #tpu.memory_space<vmem>>, %arg4: memref<9x4x4xbf16, #tpu.memory_space<vmem>>, %arg5: memref<1x4xf32, #tpu.memory_space<vmem>>, %arg6: memref<4x16xbf16, #tpu.memory_space<vmem>>, %arg7: memref<1x16xf32, #tpu.memory_space<vmem>>, %arg8: memref<1x16x16x16xf32, #tpu.memory_space<vmem>>, %arg9: memref<18x18x4xf32, #tpu.memory_space<vmem>>) attributes {dimension_semantics = [#tpu.dimension_semantics<parallel>], iteration_bounds = array<i64: 2>, scalar_prefetch = 0 : i64, scratch_operands = 1 : i64, tpu.core_type = #tpu.core_type<tc>, window_params = [{transform_indices = @transform_0, window_bounds = array<i64: 1, 16, 16, 16>}, {pipeline_mode = #tpu.pipeline_mode<synchronous>, transform_indices = @transform_1, window_bounds = array<i64: 16, 4>}, {pipeline_mode = #tpu.pipeline_mode<synchronous>, transform_indices = @transform_2, window_bounds = array<i64: 1, 4>}, {pipeline_mode = #tpu.pipeline_mode<synchronous>, transform_indices = @transform_3, window_bounds = array<i64: 9, 4, 4>}, {pipeline_mode = #tpu.pipeline_mode<synchronous>, transform_indices = @transform_4, window_bounds = array<i64: 1, 4>}, {pipeline_mode = #tpu.pipeline_mode<synchronous>, transform_indices = @transform_5, window_bounds = array<i64: 4, 16>}, {pipeline_mode = #tpu.pipeline_mode<synchronous>, transform_indices = @transform_6, window_bounds = array<i64: 1, 16>}, {transform_indices = @transform_7, window_bounds = array<i64: 1, 16, 16, 16>}]} {
    %c0 = arith.constant 0 : index
    %c0_0 = arith.constant 0 : index
    %c0_1 = arith.constant 0 : index
    %c0_2 = arith.constant 0 : index
    %0 = vector.load %arg1[%c0, %c0_0, %c0_1, %c0_2] : memref<1x16x16x16xf32, #tpu.memory_space<vmem>>, vector<1x16x16x16xf32>
    %1 = vector.shape_cast %0 : vector<1x16x16x16xf32> to vector<16x16x16xf32>
    %2 = vector.shape_cast %1 : vector<16x16x16xf32> to vector<256x16xf32>
    %3 = arith.truncf %2 : vector<256x16xf32> to vector<256x16xbf16>
    %c0_3 = arith.constant 0 : index
    %c0_4 = arith.constant 0 : index
    %4 = vector.load %arg2[%c0_3, %c0_4] : memref<16x4xbf16, #tpu.memory_space<vmem>>, vector<16x4xbf16>
    %cst = arith.constant dense<0.000000e+00> : vector<256x4xf32>
    %5 = tpu.matmul %3, %4, %cst {dimension_numbers = #tpu.dot_dimension_numbers<[1], [0], [0], [1], [0, 0, 1, 1], [], []>} : vector<256x16xbf16>, vector<16x4xbf16>, vector<256x4xf32> -> vector<256x4xf32>
    %c0_5 = arith.constant 0 : index
    %c0_6 = arith.constant 0 : index
    %6 = vector.load %arg3[%c0_5, %c0_6] : memref<1x4xf32, #tpu.memory_space<vmem>>, vector<1x4xf32>
    %7 = vector.broadcast %6 : vector<1x4xf32> to vector<256x4xf32>
    %8 = arith.addf %5, %7 : vector<256x4xf32>
    %cst_7 = arith.constant 0.000000e+00 : f32
    %9 = vector.broadcast %cst_7 : f32 to vector<256x4xf32>
    %10 = arith.maximumf %8, %9 : vector<256x4xf32>
    %cst_8 = arith.constant 0.000000e+00 : f32
    %11 = vector.broadcast %cst_8 : f32 to vector<18x18x4xf32>
    %c0_9 = arith.constant 0 : index
    %c0_10 = arith.constant 0 : index
    %c0_11 = arith.constant 0 : index
    %12 = vector.load %arg9[%c0_9, %c0_10, %c0_11] : memref<18x18x4xf32, #tpu.memory_space<vmem>>, vector<18x18x4xf32>
    tpu.vector_store %arg9[%c0_9, %c0_10, %c0_11], %11 {strides = array<i32>} : memref<18x18x4xf32, #tpu.memory_space<vmem>>, vector<18x18x4xf32>,
    %13 = vector.shape_cast %10 : vector<256x4xf32> to vector<16x16x4xf32>
    %c1 = arith.constant 1 : index
    %c1_12 = arith.constant 1 : index
    %c0_13 = arith.constant 0 : index
    %14 = vector.load %arg9[%c1, %c1_12, %c0_13] : memref<18x18x4xf32, #tpu.memory_space<vmem>>, vector<16x16x4xf32>
    tpu.vector_store %arg9[%c1, %c1_12, %c0_13], %13 {strides = array<i32>} : memref<18x18x4xf32, #tpu.memory_space<vmem>>, vector<16x16x4xf32>,
    %c0_14 = arith.constant 0 : index
    %c0_15 = arith.constant 0 : index
    %15 = vector.load %arg5[%c0_14, %c0_15] : memref<1x4xf32, #tpu.memory_space<vmem>>, vector<1x4xf32>
    %16 = vector.shape_cast %15 : vector<1x4xf32> to vector<1x4xf32>
    %17 = vector.broadcast %16 : vector<1x4xf32> to vector<256x4xf32>
    %c0_16 = arith.constant 0 : index
    %c0_17 = arith.constant 0 : index
    %c0_18 = arith.constant 0 : index
    %18 = vector.load %arg9[%c0_16, %c0_17, %c0_18] : memref<18x18x4xf32, #tpu.memory_space<vmem>>, vector<16x16x4xf32>
    %19 = vector.shape_cast %18 : vector<16x16x4xf32> to vector<256x4xf32>
    %20 = arith.truncf %19 : vector<256x4xf32> to vector<256x4xbf16>
    %c0_19 = arith.constant 0 : index
    %c0_20 = arith.constant 0 : index
    %c0_21 = arith.constant 0 : index
    %21 = vector.load %arg4[%c0_19, %c0_20, %c0_21] : memref<9x4x4xbf16, #tpu.memory_space<vmem>>, vector<1x4x4xbf16>
    %22 = vector.shape_cast %21 : vector<1x4x4xbf16> to vector<4x4xbf16>
    %cst_22 = arith.constant dense<0.000000e+00> : vector<256x4xf32>
    %23 = tpu.matmul %20, %22, %cst_22 {dimension_numbers = #tpu.dot_dimension_numbers<[1], [0], [0], [1], [0, 0, 1, 1], [], []>} : vector<256x4xbf16>, vector<4x4xbf16>, vector<256x4xf32> -> vector<256x4xf32>
    %24 = arith.addf %17, %23 : vector<256x4xf32>
    %c0_23 = arith.constant 0 : index
    %c1_24 = arith.constant 1 : index
    %c0_25 = arith.constant 0 : index
    %25 = vector.load %arg9[%c0_23, %c1_24, %c0_25] : memref<18x18x4xf32, #tpu.memory_space<vmem>>, vector<16x16x4xf32>
    %26 = vector.shape_cast %25 : vector<16x16x4xf32> to vector<256x4xf32>
    %27 = arith.truncf %26 : vector<256x4xf32> to vector<256x4xbf16>
    %c1_26 = arith.constant 1 : index
    %c0_27 = arith.constant 0 : index
    %c0_28 = arith.constant 0 : index
    %28 = vector.load %arg4[%c1_26, %c0_27, %c0_28] : memref<9x4x4xbf16, #tpu.memory_space<vmem>>, vector<1x4x4xbf16>
    %29 = vector.shape_cast %28 : vector<1x4x4xbf16> to vector<4x4xbf16>
    %cst_29 = arith.constant dense<0.000000e+00> : vector<256x4xf32>
    %30 = tpu.matmul %27, %29, %cst_29 {dimension_numbers = #tpu.dot_dimension_numbers<[1], [0], [0], [1], [0, 0, 1, 1], [], []>} : vector<256x4xbf16>, vector<4x4xbf16>, vector<256x4xf32> -> vector<256x4xf32>
    %31 = arith.addf %24, %30 : vector<256x4xf32>
    %c0_30 = arith.constant 0 : index
    %c2 = arith.constant 2 : index
    %c0_31 = arith.constant 0 : index
    %32 = vector.load %arg9[%c0_30, %c2, %c0_31] : memref<18x18x4xf32, #tpu.memory_space<vmem>>, vector<16x16x4xf32>
    %33 = vector.shape_cast %32 : vector<16x16x4xf32> to vector<256x4xf32>
    %34 = arith.truncf %33 : vector<256x4xf32> to vector<256x4xbf16>
    %c2_32 = arith.constant 2 : index
    %c0_33 = arith.constant 0 : index
    %c0_34 = arith.constant 0 : index
    %35 = vector.load %arg4[%c2_32, %c0_33, %c0_34] : memref<9x4x4xbf16, #tpu.memory_space<vmem>>, vector<1x4x4xbf16>
    %36 = vector.shape_cast %35 : vector<1x4x4xbf16> to vector<4x4xbf16>
    %cst_35 = arith.constant dense<0.000000e+00> : vector<256x4xf32>
    %37 = tpu.matmul %34, %36, %cst_35 {dimension_numbers = #tpu.dot_dimension_numbers<[1], [0], [0], [1], [0, 0, 1, 1], [], []>} : vector<256x4xbf16>, vector<4x4xbf16>, vector<256x4xf32> -> vector<256x4xf32>
    %38 = arith.addf %31, %37 : vector<256x4xf32>
    %c1_36 = arith.constant 1 : index
    %c0_37 = arith.constant 0 : index
    %c0_38 = arith.constant 0 : index
    %39 = vector.load %arg9[%c1_36, %c0_37, %c0_38] : memref<18x18x4xf32, #tpu.memory_space<vmem>>, vector<16x16x4xf32>
    %40 = vector.shape_cast %39 : vector<16x16x4xf32> to vector<256x4xf32>
    %41 = arith.truncf %40 : vector<256x4xf32> to vector<256x4xbf16>
    %c3 = arith.constant 3 : index
    %c0_39 = arith.constant 0 : index
    %c0_40 = arith.constant 0 : index
    %42 = vector.load %arg4[%c3, %c0_39, %c0_40] : memref<9x4x4xbf16, #tpu.memory_space<vmem>>, vector<1x4x4xbf16>
    %43 = vector.shape_cast %42 : vector<1x4x4xbf16> to vector<4x4xbf16>
    %cst_41 = arith.constant dense<0.000000e+00> : vector<256x4xf32>
    %44 = tpu.matmul %41, %43, %cst_41 {dimension_numbers = #tpu.dot_dimension_numbers<[1], [0], [0], [1], [0, 0, 1, 1], [], []>} : vector<256x4xbf16>, vector<4x4xbf16>, vector<256x4xf32> -> vector<256x4xf32>
    %45 = arith.addf %38, %44 : vector<256x4xf32>
    %c1_42 = arith.constant 1 : index
    %c1_43 = arith.constant 1 : index
    %c0_44 = arith.constant 0 : index
    %46 = vector.load %arg9[%c1_42, %c1_43, %c0_44] : memref<18x18x4xf32, #tpu.memory_space<vmem>>, vector<16x16x4xf32>
    %47 = vector.shape_cast %46 : vector<16x16x4xf32> to vector<256x4xf32>
    %48 = arith.truncf %47 : vector<256x4xf32> to vector<256x4xbf16>
    %c4 = arith.constant 4 : index
    %c0_45 = arith.constant 0 : index
    %c0_46 = arith.constant 0 : index
    %49 = vector.load %arg4[%c4, %c0_45, %c0_46] : memref<9x4x4xbf16, #tpu.memory_space<vmem>>, vector<1x4x4xbf16>
    %50 = vector.shape_cast %49 : vector<1x4x4xbf16> to vector<4x4xbf16>
    %cst_47 = arith.constant dense<0.000000e+00> : vector<256x4xf32>
    %51 = tpu.matmul %48, %50, %cst_47 {dimension_numbers = #tpu.dot_dimension_numbers<[1], [0], [0], [1], [0, 0, 1, 1], [], []>} : vector<256x4xbf16>, vector<4x4xbf16>, vector<256x4xf32> -> vector<256x4xf32>
    %52 = arith.addf %45, %51 : vector<256x4xf32>
    %c1_48 = arith.constant 1 : index
    %c2_49 = arith.constant 2 : index
    %c0_50 = arith.constant 0 : index
    %53 = vector.load %arg9[%c1_48, %c2_49, %c0_50] : memref<18x18x4xf32, #tpu.memory_space<vmem>>, vector<16x16x4xf32>
    %54 = vector.shape_cast %53 : vector<16x16x4xf32> to vector<256x4xf32>
    %55 = arith.truncf %54 : vector<256x4xf32> to vector<256x4xbf16>
    %c5 = arith.constant 5 : index
    %c0_51 = arith.constant 0 : index
    %c0_52 = arith.constant 0 : index
    %56 = vector.load %arg4[%c5, %c0_51, %c0_52] : memref<9x4x4xbf16, #tpu.memory_space<vmem>>, vector<1x4x4xbf16>
    %57 = vector.shape_cast %56 : vector<1x4x4xbf16> to vector<4x4xbf16>
    %cst_53 = arith.constant dense<0.000000e+00> : vector<256x4xf32>
    %58 = tpu.matmul %55, %57, %cst_53 {dimension_numbers = #tpu.dot_dimension_numbers<[1], [0], [0], [1], [0, 0, 1, 1], [], []>} : vector<256x4xbf16>, vector<4x4xbf16>, vector<256x4xf32> -> vector<256x4xf32>
    %59 = arith.addf %52, %58 : vector<256x4xf32>
    %c2_54 = arith.constant 2 : index
    %c0_55 = arith.constant 0 : index
    %c0_56 = arith.constant 0 : index
    %60 = vector.load %arg9[%c2_54, %c0_55, %c0_56] : memref<18x18x4xf32, #tpu.memory_space<vmem>>, vector<16x16x4xf32>
    %61 = vector.shape_cast %60 : vector<16x16x4xf32> to vector<256x4xf32>
    %62 = arith.truncf %61 : vector<256x4xf32> to vector<256x4xbf16>
    %c6 = arith.constant 6 : index
    %c0_57 = arith.constant 0 : index
    %c0_58 = arith.constant 0 : index
    %63 = vector.load %arg4[%c6, %c0_57, %c0_58] : memref<9x4x4xbf16, #tpu.memory_space<vmem>>, vector<1x4x4xbf16>
    %64 = vector.shape_cast %63 : vector<1x4x4xbf16> to vector<4x4xbf16>
    %cst_59 = arith.constant dense<0.000000e+00> : vector<256x4xf32>
    %65 = tpu.matmul %62, %64, %cst_59 {dimension_numbers = #tpu.dot_dimension_numbers<[1], [0], [0], [1], [0, 0, 1, 1], [], []>} : vector<256x4xbf16>, vector<4x4xbf16>, vector<256x4xf32> -> vector<256x4xf32>
    %66 = arith.addf %59, %65 : vector<256x4xf32>
    %c2_60 = arith.constant 2 : index
    %c1_61 = arith.constant 1 : index
    %c0_62 = arith.constant 0 : index
    %67 = vector.load %arg9[%c2_60, %c1_61, %c0_62] : memref<18x18x4xf32, #tpu.memory_space<vmem>>, vector<16x16x4xf32>
    %68 = vector.shape_cast %67 : vector<16x16x4xf32> to vector<256x4xf32>
    %69 = arith.truncf %68 : vector<256x4xf32> to vector<256x4xbf16>
    %c7 = arith.constant 7 : index
    %c0_63 = arith.constant 0 : index
    %c0_64 = arith.constant 0 : index
    %70 = vector.load %arg4[%c7, %c0_63, %c0_64] : memref<9x4x4xbf16, #tpu.memory_space<vmem>>, vector<1x4x4xbf16>
    %71 = vector.shape_cast %70 : vector<1x4x4xbf16> to vector<4x4xbf16>
    %cst_65 = arith.constant dense<0.000000e+00> : vector<256x4xf32>
    %72 = tpu.matmul %69, %71, %cst_65 {dimension_numbers = #tpu.dot_dimension_numbers<[1], [0], [0], [1], [0, 0, 1, 1], [], []>} : vector<256x4xbf16>, vector<4x4xbf16>, vector<256x4xf32> -> vector<256x4xf32>
    %73 = arith.addf %66, %72 : vector<256x4xf32>
    %c2_66 = arith.constant 2 : index
    %c2_67 = arith.constant 2 : index
    %c0_68 = arith.constant 0 : index
    %74 = vector.load %arg9[%c2_66, %c2_67, %c0_68] : memref<18x18x4xf32, #tpu.memory_space<vmem>>, vector<16x16x4xf32>
    %75 = vector.shape_cast %74 : vector<16x16x4xf32> to vector<256x4xf32>
    %76 = arith.truncf %75 : vector<256x4xf32> to vector<256x4xbf16>
    %c8 = arith.constant 8 : index
    %c0_69 = arith.constant 0 : index
    %c0_70 = arith.constant 0 : index
    %77 = vector.load %arg4[%c8, %c0_69, %c0_70] : memref<9x4x4xbf16, #tpu.memory_space<vmem>>, vector<1x4x4xbf16>
    %78 = vector.shape_cast %77 : vector<1x4x4xbf16> to vector<4x4xbf16>
    %cst_71 = arith.constant dense<0.000000e+00> : vector<256x4xf32>
    %79 = tpu.matmul %76, %78, %cst_71 {dimension_numbers = #tpu.dot_dimension_numbers<[1], [0], [0], [1], [0, 0, 1, 1], [], []>} : vector<256x4xbf16>, vector<4x4xbf16>, vector<256x4xf32> -> vector<256x4xf32>
    %80 = arith.addf %73, %79 : vector<256x4xf32>
    %cst_72 = arith.constant 0.000000e+00 : f32
    %81 = vector.broadcast %cst_72 : f32 to vector<256x4xf32>
    %82 = arith.maximumf %80, %81 : vector<256x4xf32>
    %83 = arith.truncf %82 : vector<256x4xf32> to vector<256x4xbf16>
    %c0_73 = arith.constant 0 : index
    %c0_74 = arith.constant 0 : index
    %84 = vector.load %arg6[%c0_73, %c0_74] : memref<4x16xbf16, #tpu.memory_space<vmem>>, vector<4x16xbf16>
    %cst_75 = arith.constant dense<0.000000e+00> : vector<256x16xf32>
    %85 = tpu.matmul %83, %84, %cst_75 {dimension_numbers = #tpu.dot_dimension_numbers<[1], [0], [0], [1], [0, 0, 1, 1], [], []>} : vector<256x4xbf16>, vector<4x16xbf16>, vector<256x16xf32> -> vector<256x16xf32>
    %c0_76 = arith.constant 0 : index
    %c0_77 = arith.constant 0 : index
    %86 = vector.load %arg7[%c0_76, %c0_77] : memref<1x16xf32, #tpu.memory_space<vmem>>, vector<1x16xf32>
    %87 = vector.broadcast %86 : vector<1x16xf32> to vector<256x16xf32>
    %88 = arith.addf %2, %87 : vector<256x16xf32>
    %89 = arith.addf %85, %88 : vector<256x16xf32>
    %cst_78 = arith.constant 0.000000e+00 : f32
    %90 = vector.broadcast %cst_78 : f32 to vector<256x16xf32>
    %91 = arith.maximumf %89, %90 : vector<256x16xf32>
    %92 = vector.shape_cast %91 : vector<256x16xf32> to vector<16x16x16xf32>
    %c0_79 = arith.constant 0 : index
    %c0_80 = arith.constant 0 : index
    %c0_81 = arith.constant 0 : index
    %c0_82 = arith.constant 0 : index
    %93 = vector.load %arg8[%c0_79, %c0_80, %c0_81, %c0_82] : memref<1x16x16x16xf32, #tpu.memory_space<vmem>>, vector<1x16x16x16xf32>
    %94 = vector.shape_cast %93 : vector<1x16x16x16xf32> to vector<16x16x16xf32>
    %95 = vector.shape_cast %92 : vector<16x16x16xf32> to vector<1x16x16x16xf32>
    tpu.vector_store %arg8[%c0_79, %c0_80, %c0_81, %c0_82], %95 {strides = array<i32>} : memref<1x16x16x16xf32, #tpu.memory_space<vmem>>, vector<1x16x16x16xf32>,
    return
  }
  func.func @transform_0(%arg0: i32) -> (i32, i32, i32, i32) {
    %c0_i32 = arith.constant 0 : i32
    %c0_i32_0 = arith.constant 0 : i32
    %c0_i32_1 = arith.constant 0 : i32
    %c0_i32_2 = arith.constant 0 : i32
    return %arg0, %c0_i32, %c0_i32_0, %c0_i32_1 : i32, i32, i32, i32
  }
  func.func @transform_1(%arg0: i32) -> (i32, i32) {
    %c0_i32 = arith.constant 0 : i32
    %c0_i32_0 = arith.constant 0 : i32
    %c0_i32_1 = arith.constant 0 : i32
    return %c0_i32, %c0_i32_0 : i32, i32
  }
  func.func @transform_2(%arg0: i32) -> (i32, i32) {
    %c0_i32 = arith.constant 0 : i32
    %c0_i32_0 = arith.constant 0 : i32
    %c0_i32_1 = arith.constant 0 : i32
    return %c0_i32, %c0_i32_0 : i32, i32
  }
  func.func @transform_3(%arg0: i32) -> (i32, i32, i32) {
    %c0_i32 = arith.constant 0 : i32
    %c0_i32_0 = arith.constant 0 : i32
    %c0_i32_1 = arith.constant 0 : i32
    %c0_i32_2 = arith.constant 0 : i32
    return %c0_i32, %c0_i32_0, %c0_i32_1 : i32, i32, i32
  }
  func.func @transform_4(%arg0: i32) -> (i32, i32) {
    %c0_i32 = arith.constant 0 : i32
    %c0_i32_0 = arith.constant 0 : i32
    %c0_i32_1 = arith.constant 0 : i32
    return %c0_i32, %c0_i32_0 : i32, i32
  }
  func.func @transform_5(%arg0: i32) -> (i32, i32) {
    %c0_i32 = arith.constant 0 : i32
    %c0_i32_0 = arith.constant 0 : i32
    %c0_i32_1 = arith.constant 0 : i32
    return %c0_i32, %c0_i32_0 : i32, i32
  }
  func.func @transform_6(%arg0: i32) -> (i32, i32) {
    %c0_i32 = arith.constant 0 : i32
    %c0_i32_0 = arith.constant 0 : i32
    %c0_i32_1 = arith.constant 0 : i32
    return %c0_i32, %c0_i32_0 : i32, i32
  }
  func.func @transform_7(%arg0: i32) -> (i32, i32, i32, i32) {
    %c0_i32 = arith.constant 0 : i32
    %c0_i32_0 = arith.constant 0 : i32
    %c0_i32_1 = arith.constant 0 : i32
    %c0_i32_2 = arith.constant 0 : i32
    return %arg0, %c0_i32, %c0_i32_0, %c0_i32_1 : i32, i32, i32, i32
  }
}

</mosaic_0001>

<llo_original>
// kernel: bottleneck_forward.1
$region0: #{bottleneck_forward.1}
  #allocation0 [shape = 'u32[]', space=smem, size = 0x4, offset = 0x4, fixed_abs, tag = 'smem constant byte address 0x4 - core index']
  #allocation1 [shape = 'u32[72,128]{1,0:T(1,128)}', space=vmem, size = 0x9000, scoped, tag = 'internal scratch']
  #allocation2 [shape = 'f32[18,18,4]{2,1,0:T(8,128)}', space=vmem, size = 0x36000, scoped, tag = 'scratch operand']
  %s0 = inlined_call_operand.vmem [shape: f32[2,16,16,16], index: 0, kind: input, shape index: {}]
  %s1 = inlined_call_operand.vmem [shape: bf16[16,4], index: 1, kind: input, shape index: {}]
  %s2 = inlined_call_operand.vmem [shape: f32[1,4], index: 2, kind: input, shape index: {}]
  %s3 = inlined_call_operand.vmem [shape: bf16[9,4,4], index: 3, kind: input, shape index: {}]
  %s4 = inlined_call_operand.vmem [shape: f32[1,4], index: 4, kind: input, shape index: {}]
  %s5 = inlined_call_operand.vmem [shape: bf16[4,16], index: 5, kind: input, shape index: {}]
  %s6 = inlined_call_operand.vmem [shape: f32[1,16], index: 6, kind: input, shape index: {}]
  %s7 = inlined_call_operand.vmem [shape: f32[2,16,16,16], index: 7, kind: output, shape index: {}]
  %s8 = sld [smem:[#allocation0]]
  $region61: #{bottleneck_forward.1} parent=0
    _
  %s10 = ssub.s32 1, %s8
  %s11 = scalar_select 0, %s10, %s8
  loop: start=0, step=1, limit=4
  $region2: #{bottleneck_forward.1} parent=0 // loop_pre_header
    _
  $region3: #{bottleneck_forward.1} parent=0 // loop_header
    %s13 = sphi 0, %s17
    %p14 = scmp.ge.s32.totalorder %s13, 4
    %s23 = sphi 0, %s25
    %s26 = sphi 0, %s23
    %s27 = sphi 0, %s26
    %s43 = sphi 0, %s27
    %s47 = sphi 0, %s47
    %s49 = sphi 0, %s47
    %s50 = sphi 0, %s49
    %s64 = sphi 0, %s50
    %s68 = sphi 0, %s68
    %s70 = sphi 0, %s68
    %s71 = sphi 0, %s70
    %s85 = sphi 0, %s71
    %s89 = sphi 0, %s89
    %s91 = sphi 0, %s89
    %s92 = sphi 0, %s91
    %s106 = sphi 0, %s92
    %s110 = sphi 0, %s110
    %s112 = sphi 0, %s110
    %s113 = sphi 0, %s112
    %s127 = sphi 0, %s113
    %s131 = sphi 0, %s131
    %s133 = sphi 0, %s131
    %s134 = sphi 0, %s133
    %s148 = sphi 0, %s134
    %s152 = sphi 0, %s152
    %s154 = sphi 0, %s152
    %s155 = sphi 0, %s154
    %s169 = sphi 0, %s155
    %s175 = sphi 0, %s177
    %s178 = sphi 0, %s175
    %s179 = sphi 0, %s178
    %s195 = sphi 0, %s179
  $region4: #{bottleneck_forward.1} parent=0 // loop_header_branch
    %16 = sbr.rel (%p14) target = $region8
  $region5: #{bottleneck_forward.1} parent=0 // loop_body
    %s18 = ssub.s32 %s13, 1
    %s19 = ssub.s32 %s13, 2
    %s20 = sadd.s32 %s13, 1
    %s21 = ssub.s32 %s13, %s20
    %p22 = scmp.eq.s32.totalorder %s21, 0
    %s24 = sadd.s32 %s23, 1
    %s25 = scalar_select %p22, %s23, %s24
    %p28 = pneg %p22
    %p29 = scmp.eq.s32.totalorder %s13, 1
    %p30 = por %p28, %p29
    %p31 = scmp.ne.s32.totalorder %s23, %s26
    %p32 = scmp.eq.s32.totalorder %s13, 0
    %p33 = por %p31, %p32
    %p34 = scmp.ne.s32.totalorder %s23, %s26
    %p35 = scmp.eq.s32.totalorder %s18, 1
    %p36 = por %p34, %p35
    %p37 = scmp.ne.s32.totalorder %s26, %s27
    %p38 = scmp.eq.s32.totalorder %s18, 0
    %p39 = por %p37, %p38
    %p40 = scmp.ne.s32.totalorder %s26, %s27
    %p41 = scmp.eq.s32.totalorder %s19, 1
    %p42 = por %p40, %p41
    %p44 = scmp.ne.s32.totalorder %s27, %s43
    %p45 = scmp.eq.s32.totalorder %s19, 0
    %p46 = por %p44, %p45
    %s48 = sadd.s32 %s47, 1
    %p51 = scmp.eq.s32.totalorder %s13, 1
    %p52 = scmp.ne.s32.totalorder %s47, %s49
    %p53 = scmp.eq.s32.totalorder %s13, 0
    %p54 = por %p52, %p53
    %p55 = scmp.ne.s32.totalorder %s47, %s49
    %p56 = scmp.eq.s32.totalorder %s18, 1
    %p57 = por %p55, %p56
    %p58 = scmp.ne.s32.totalorder %s49, %s50
    %p59 = scmp.eq.s32.totalorder %s18, 0
    %p60 = por %p58, %p59
    %p61 = scmp.ne.s32.totalorder %s49, %s50
    %p62 = scmp.eq.s32.totalorder %s19, 1
    %p63 = por %p61, %p62
    %p65 = scmp.ne.s32.totalorder %s50, %s64
    %p66 = scmp.eq.s32.totalorder %s19, 0
    %p67 = por %p65, %p66
    %s69 = sadd.s32 %s68, 1
    %p72 = scmp.eq.s32.totalorder %s13, 1
    %p73 = scmp.ne.s32.totalorder %s68, %s70
    %p74 = scmp.eq.s32.totalorder %s13, 0
    %p75 = por %p73, %p74
    %p76 = scmp.ne.s32.totalorder %s68, %s70
    %p77 = scmp.eq.s32.totalorder %s18, 1
    %p78 = por %p76, %p77
    %p79 = scmp.ne.s32.totalorder %s70, %s71
    %p80 = scmp.eq.s32.totalorder %s18, 0
    %p81 = por %p79, %p80
    %p82 = scmp.ne.s32.totalorder %s70, %s71
    %p83 = scmp.eq.s32.totalorder %s19, 1
    %p84 = por %p82, %p83
    %p86 = scmp.ne.s32.totalorder %s71, %s85
    %p87 = scmp.eq.s32.totalorder %s19, 0
    %p88 = por %p86, %p87
    %s90 = sadd.s32 %s89, 1
    %p93 = scmp.eq.s32.totalorder %s13, 1
    %p94 = scmp.ne.s32.totalorder %s89, %s91
    %p95 = scmp.eq.s32.totalorder %s13, 0
    %p96 = por %p94, %p95
    %p97 = scmp.ne.s32.totalorder %s89, %s91
    %p98 = scmp.eq.s32.totalorder %s18, 1
    %p99 = por %p97, %p98
    %p100 = scmp.ne.s32.totalorder %s91, %s92
    %p101 = scmp.eq.s32.totalorder %s18, 0
    %p102 = por %p100, %p101
    %p103 = scmp.ne.s32.totalorder %s91, %s92
    %p104 = scmp.eq.s32.totalorder %s19, 1
    %p105 = por %p103, %p104
    %p107 = scmp.ne.s32.totalorder %s92, %s106
    %p108 = scmp.eq.s32.totalorder %s19, 0
    %p109 = por %p107, %p108
    %s111 = sadd.s32 %s110, 1
    %p114 = scmp.eq.s32.totalorder %s13, 1
    %p115 = scmp.ne.s32.totalorder %s110, %s112
    %p116 = scmp.eq.s32.totalorder %s13, 0
    %p117 = por %p115, %p116
    %p118 = scmp.ne.s32.totalorder %s110, %s112
    %p119 = scmp.eq.s32.totalorder %s18, 1
    %p120 = por %p118, %p119
    %p121 = scmp.ne.s32.totalorder %s112, %s113
    %p122 = scmp.eq.s32.totalorder %s18, 0
    %p123 = por %p121, %p122
    %p124 = scmp.ne.s32.totalorder %s112, %s113
    %p125 = scmp.eq.s32.totalorder %s19, 1
    %p126 = por %p124, %p125
    %p128 = scmp.ne.s32.totalorder %s113, %s127
    %p129 = scmp.eq.s32.totalorder %s19, 0
    %p130 = por %p128, %p129
    %s132 = sadd.s32 %s131, 1
    %p135 = scmp.eq.s32.totalorder %s13, 1
    %p136 = scmp.ne.s32.totalorder %s131, %s133
    %p137 = scmp.eq.s32.totalorder %s13, 0
    %p138 = por %p136, %p137
    %p139 = scmp.ne.s32.totalorder %s131, %s133
    %p140 = scmp.eq.s32.totalorder %s18, 1
    %p141 = por %p139, %p140
    %p142 = scmp.ne.s32.totalorder %s133, %s134
    %p143 = scmp.eq.s32.totalorder %s18, 0
    %p144 = por %p142, %p143
    %p145 = scmp.ne.s32.totalorder %s133, %s134
    %p146 = scmp.eq.s32.totalorder %s19, 1
    %p147 = por %p145, %p146
    %p149 = scmp.ne.s32.totalorder %s134, %s148
    %p150 = scmp.eq.s32.totalorder %s19, 0
    %p151 = por %p149, %p150
    %s153 = sadd.s32 %s152, 1
    %p156 = scmp.eq.s32.totalorder %s13, 1
    %p157 = scmp.ne.s32.totalorder %s152, %s154
    %p158 = scmp.eq.s32.totalorder %s13, 0
    %p159 = por %p157, %p158
    %p160 = scmp.ne.s32.totalorder %s152, %s154
    %p161 = scmp.eq.s32.totalorder %s18, 1
    %p162 = por %p160, %p161
    %p163 = scmp.ne.s32.totalorder %s154, %s155
    %p164 = scmp.eq.s32.totalorder %s18, 0
    %p165 = por %p163, %p164
    %p166 = scmp.ne.s32.totalorder %s154, %s155
    %p167 = scmp.eq.s32.totalorder %s19, 1
    %p168 = por %p166, %p167
    %p170 = scmp.ne.s32.totalorder %s155, %s169
    %p171 = scmp.eq.s32.totalorder %s19, 0
    %p172 = por %p170, %p171
    %s173 = ssub.s32 %s13, %s20
    %p174 = scmp.eq.s32.totalorder %s173, 0
    %s176 = sadd.s32 %s175, 1
    %s177 = scalar_select %p174, %s175, %s176
    %p180 = pneg %p174
    %p181 = scmp.eq.s32.totalorder %s13, 1
    %p182 = por %p180, %p181
    %p183 = scmp.ne.s32.totalorder %s175, %s178
    %p184 = scmp.eq.s32.totalorder %s13, 0
    %p185 = por %p183, %p184
    %p186 = scmp.ne.s32.totalorder %s175, %s178
    %p187 = scmp.eq.s32.totalorder %s18, 1
    %p188 = por %p186, %p187
    %p189 = scmp.ne.s32.totalorder %s178, %s179
    %p190 = scmp.eq.s32.totalorder %s18, 0
    %p191 = por %p189, %p190
    %p192 = scmp.ne.s32.totalorder %s178, %s179
    %p193 = scmp.eq.s32.totalorder %s19, 1
    %p194 = por %p192, %p193
    %p196 = scmp.ne.s32.totalorder %s179, %s195
    %p197 = scmp.eq.s32.totalorder %s19, 0
    %p198 = por %p196, %p197
    %p199 = scmp.le.s32.totalorder 1, %s13
    %p200 = scmp.lt.s32.totalorder %s13, 3
    %p201 = pnand %p199, %p200
    %p202 = pneg %p201
    // Predicated region
    $region9: #{bottleneck_forward.1} parent=5 // pred_check
      _
    $region10: #{bottleneck_forward.1} parent=5 // pred_check_branch
      %204 = sbr.rel (%p201) target = $region12
    $region11: #{bottleneck_forward.1} parent=5 // pred_region
      %s205 = ssub.s32 %s13, 1
      // Predicated region
      $region13: #{bottleneck_forward.1} parent=11 // pred_check
        %p206 = pneg %p60
      $region14: #{bottleneck_forward.1} parent=11 // pred_check_branch
        %208 = sbr.rel (%p206) target = $region16
      $region15: #{bottleneck_forward.1} parent=11 // pred_region
        _
      $region16: #{bottleneck_forward.1} parent=11 // pred_fallthru
        _
      // Predicated region
      $region17: #{bottleneck_forward.1} parent=11 // pred_check
        %p209 = pneg %p81
      $region18: #{bottleneck_forward.1} parent=11 // pred_check_branch
        %211 = sbr.rel (%p209) target = $region20
      $region19: #{bottleneck_forward.1} parent=11 // pred_region
        _
      $region20: #{bottleneck_forward.1} parent=11 // pred_fallthru
        _
      // Predicated region
      $region21: #{bottleneck_forward.1} parent=11 // pred_check
        %p212 = pneg %p102
      $region22: #{bottleneck_forward.1} parent=11 // pred_check_branch
        %214 = sbr.rel (%p212) target = $region24
      $region23: #{bottleneck_forward.1} parent=11 // pred_region
        _
      $region24: #{bottleneck_forward.1} parent=11 // pred_fallthru
        _
      // Predicated region
      $region25: #{bottleneck_forward.1} parent=11 // pred_check
        %p215 = pneg %p123
      $region26: #{bottleneck_forward.1} parent=11 // pred_check_branch
        %217 = sbr.rel (%p215) target = $region28
      $region27: #{bottleneck_forward.1} parent=11 // pred_region
        _
      $region28: #{bottleneck_forward.1} parent=11 // pred_fallthru
        _
      // Predicated region
      $region29: #{bottleneck_forward.1} parent=11 // pred_check
        %p218 = pneg %p144
      $region30: #{bottleneck_forward.1} parent=11 // pred_check_branch
        %220 = sbr.rel (%p218) target = $region32
      $region31: #{bottleneck_forward.1} parent=11 // pred_region
        _
      $region32: #{bottleneck_forward.1} parent=11 // pred_fallthru
        _
      // Predicated region
      $region33: #{bottleneck_forward.1} parent=11 // pred_check
        %p221 = pneg %p165
      $region34: #{bottleneck_forward.1} parent=11 // pred_check_branch
        %223 = sbr.rel (%p221) target = $region36
      $region35: #{bottleneck_forward.1} parent=11 // pred_region
        _
      $region36: #{bottleneck_forward.1} parent=11 // pred_fallthru
        _
    $region12: #{bottleneck_forward.1} parent=5 // pred_fallthru
      _
    %p224 = scmp.lt.s32.totalorder %s13, 2
    // Predicated region
    $region37: #{bottleneck_forward.1} parent=5 // pred_check
      %p225 = pneg %p224
    $region38: #{bottleneck_forward.1} parent=5 // pred_check_branch
      %227 = sbr.rel (%p225) target = $region40
    $region39: #{bottleneck_forward.1} parent=5 // pred_region
      // Predicated region
      $region41: #{bottleneck_forward.1} parent=39 // pred_check
        %p228 = pneg %p33
      $region42: #{bottleneck_forward.1} parent=39 // pred_check_branch
        %230 = sbr.rel (%p228) target = $region44
      $region43: #{bottleneck_forward.1} parent=39 // pred_region
        %p231 = scmp.lt.s32.totalorder %s13, 1
        %s232 = scalar_select %p231, %s13, 1
        %s233 = smul.addr %s232, 32
        %s234 = smul.addr %s233, 8
        %s235 = scalar_lea.vmem %s0, %s234
      $region44: #{bottleneck_forward.1} parent=39 // pred_fallthru
        _
    $region40: #{bottleneck_forward.1} parent=5 // pred_fallthru
      _
    %p236 = scmp.le.s32.totalorder 1, %s13
    %p237 = scmp.lt.s32.totalorder %s13, 3
    %p238 = pnand %p236, %p237
    %p239 = pneg %p238
    // Predicated region
    $region45: #{bottleneck_forward.1} parent=5 // pred_check
      _
    $region46: #{bottleneck_forward.1} parent=5 // pred_check_branch
      %241 = sbr.rel (%p238) target = $region48
    $region47: #{bottleneck_forward.1} parent=5 // pred_region
      %s242 = ssub.s32 %s13, 1
      %p243 = scmp.lt.s32.totalorder %s18, 1
      %s244 = scalar_select %p243, %s18, 1
      %s245 = smul.addr %s244, 32
      %s246 = smul.addr %s245, 8
      %s247 = scalar_lea.vmem %s0, %s246
      %p248 = pneg %p39
      %p249 = pneg %p36
      %p250 = pneg %p60
      %p251 = pneg %p57
      %p252 = pneg %p81
      %p253 = pneg %p78
      %p254 = pneg %p102
      %p255 = pneg %p99
      %p256 = pneg %p123
      %p257 = pneg %p120
      %p258 = pneg %p144
      %p259 = pneg %p141
      %p260 = pneg %p165
      %p261 = pneg %p162
      %p262 = pneg %p191
      %p263 = pneg %p188
      %p264 = scmp.lt.s32.totalorder %s18, 1
      %s265 = scalar_select %p264, %s18, 1
      %s266 = smul.addr %s265, 32
      %s267 = smul.addr %s266, 8
      %s268 = scalar_lea.vmem %s7, %s267
      %p269 = scmp.lt.s32.totalorder %s18, 1
      %s270 = scalar_select %p269, %s18, 1
      %s271 = smul.addr %s270, 32
      %s272 = smul.addr %s271, 8
      %s273 = scalar_lea.vmem %s0, %s272
      %p274 = scmp.lt.s32.totalorder %s18, 1
      %s275 = scalar_select %p274, %s18, 1
      %s276 = smul.addr %s275, 32
      %s277 = smul.addr %s276, 8
      %s278 = scalar_lea.vmem %s7, %s277
      %v280 = vld [vmem:[%s273] sm:$0xff]
      %v281 = vld [vmem:[%s273 + $0x8] sm:$0xff]
      %v282 = vld [vmem:[%s273 + $0x10] sm:$0xff]
      %v283 = vld [vmem:[%s273 + $0x18] sm:$0xff]
      %v284 = vld [vmem:[%s273 + $0x20] sm:$0xff]
      %v285 = vld [vmem:[%s273 + $0x28] sm:$0xff]
      %v286 = vld [vmem:[%s273 + $0x30] sm:$0xff]
      %v287 = vld [vmem:[%s273 + $0x38] sm:$0xff]
      %v288 = vld [vmem:[%s273 + $0x40] sm:$0xff]
      %v289 = vld [vmem:[%s273 + $0x48] sm:$0xff]
      %v290 = vld [vmem:[%s273 + $0x50] sm:$0xff]
      %v291 = vld [vmem:[%s273 + $0x58] sm:$0xff]
      %v292 = vld [vmem:[%s273 + $0x60] sm:$0xff]
      %v293 = vld [vmem:[%s273 + $0x68] sm:$0xff]
      %v294 = vld [vmem:[%s273 + $0x70] sm:$0xff]
      %v295 = vld [vmem:[%s273 + $0x78] sm:$0xff]
      %v296 = vld [vmem:[%s273 + $0x80] sm:$0xff]
      %v297 = vld [vmem:[%s273 + $0x88] sm:$0xff]
      %v298 = vld [vmem:[%s273 + $0x90] sm:$0xff]
      %v299 = vld [vmem:[%s273 + $0x98] sm:$0xff]
      %v300 = vld [vmem:[%s273 + $0xa0] sm:$0xff]
      %v301 = vld [vmem:[%s273 + $0xa8] sm:$0xff]
      %v302 = vld [vmem:[%s273 + $0xb0] sm:$0xff]
      %v303 = vld [vmem:[%s273 + $0xb8] sm:$0xff]
      %v304 = vld [vmem:[%s273 + $0xc0] sm:$0xff]
      %v305 = vld [vmem:[%s273 + $0xc8] sm:$0xff]
      %v306 = vld [vmem:[%s273 + $0xd0] sm:$0xff]
      %v307 = vld [vmem:[%s273 + $0xd8] sm:$0xff]
      %v308 = vld [vmem:[%s273 + $0xe0] sm:$0xff]
      %v309 = vld [vmem:[%s273 + $0xe8] sm:$0xff]
      %v310 = vld [vmem:[%s273 + $0xf0] sm:$0xff]
      %v311 = vld [vmem:[%s273 + $0xf8] sm:$0xff]
      %v312 = vpack.c.bf16 %v281, %v280
      %v313 = vpack.c.bf16 %v283, %v282
      %v314 = vpack.c.bf16 %v285, %v284
      %v315 = vpack.c.bf16 %v287, %v286
      %v316 = vpack.c.bf16 %v289, %v288
      %v317 = vpack.c.bf16 %v291, %v290
      %v318 = vpack.c.bf16 %v293, %v292
      %v319 = vpack.c.bf16 %v295, %v294
      %v320 = vpack.c.bf16 %v297, %v296
      %v321 = vpack.c.bf16 %v299, %v298
      %v322 = vpack.c.bf16 %v301, %v300
      %v323 = vpack.c.bf16 %v303, %v302
      %v324 = vpack.c.bf16 %v305, %v304
      %v325 = vpack.c.bf16 %v307, %v306
      %v326 = vpack.c.bf16 %v309, %v308
      %v327 = vpack.c.bf16 %v311, %v310
      %v328 = vld [vmem:[%s1] sm:$0xf]
      %v329 = vld [vmem:[%s1 + $0x4] sm:$0xf]
      %v330 = vld [vmem:[%s2] sm:$0x1]
      %v332 = vperm.slane %v330, 0
      %v336 = vunpack.c.l.b16 %v328
      %v337 = vunpack.c.l.b16 %v329
      %v338 = vpack.c.b16 %v337, %v336
      %vm340 = vcmask 130048
      %v342 = vsel %vm340, %v312, 0
      %v345 = vsel %vm340, %v313, 0
      %v348 = vsel %vm340, %v314, 0
      %v351 = vsel %vm340, %v315, 0
      %v354 = vsel %vm340, %v316, 0
      %v357 = vsel %vm340, %v317, 0
      %v360 = vsel %vm340, %v318, 0
      %v363 = vsel %vm340, %v319, 0
      %v366 = vsel %vm340, %v320, 0
      %v369 = vsel %vm340, %v321, 0
      %v372 = vsel %vm340, %v322, 0
      %v375 = vsel %vm340, %v323, 0
      %v378 = vsel %vm340, %v324, 0
      %v381 = vsel %vm340, %v325, 0
      %v384 = vsel %vm340, %v326, 0
      %v387 = vsel %vm340, %v327, 0
      %389 = vmatpush.bf16.msra.mxu0 0
      %390 = vmatpush.bf16.msra.mxu0 0
      %391 = vmatpush.bf16.msra.mxu0 0
      %392 = vmatpush.bf16.msra.mxu0 0
      %393 = vmatpush.bf16.msra.mxu0 0
      %394 = vmatpush.bf16.msra.mxu0 0
      %395 = vmatpush.bf16.msra.mxu0 0
      %396 = vmatpush.bf16.msra.mxu0 %v338
      %397 = vmatmul.bf16.gmra.mxu0 %v342
      %v398 = vpop.f32.mrf.mxu0
      %v399 = vadd.f32 %v332, %v398
      %v400 = vpop.f32.mrf.mxu0
      %v401 = vadd.f32 %v332, %v400
      %402 = vmatmul.bf16.gmra.mxu0 %v345
      %v403 = vpop.f32.mrf.mxu0
      %v404 = vadd.f32 %v332, %v403
      %v405 = vpop.f32.mrf.mxu0
      %v406 = vadd.f32 %v332, %v405
      %407 = vmatmul.bf16.gmra.mxu0 %v348
      %v408 = vpop.f32.mrf.mxu0
      %v409 = vadd.f32 %v332, %v408
      %v410 = vpop.f32.mrf.mxu0
      %v411 = vadd.f32 %v332, %v410
      %412 = vmatmul.bf16.gmra.mxu0 %v351
      %v413 = vpop.f32.mrf.mxu0
      %v414 = vadd.f32 %v332, %v413
      %v415 = vpop.f32.mrf.mxu0
      %v416 = vadd.f32 %v332, %v415
      %417 = vmatmul.bf16.gmra.mxu0 %v354
      %v418 = vpop.f32.mrf.mxu0
      %v419 = vadd.f32 %v332, %v418
      %v420 = vpop.f32.mrf.mxu0
      %v421 = vadd.f32 %v332, %v420
      %422 = vmatmul.bf16.gmra.mxu0 %v357
      %v423 = vpop.f32.mrf.mxu0
      %v424 = vadd.f32 %v332, %v423
      %v425 = vpop.f32.mrf.mxu0
      %v426 = vadd.f32 %v332, %v425
      %427 = vmatmul.bf16.gmra.mxu0 %v360
      %v428 = vpop.f32.mrf.mxu0
      %v429 = vadd.f32 %v332, %v428
      %v430 = vpop.f32.mrf.mxu0
      %v431 = vadd.f32 %v332, %v430
      %432 = vmatmul.bf16.gmra.mxu0 %v363
      %v433 = vpop.f32.mrf.mxu0
      %v434 = vadd.f32 %v332, %v433
      %v435 = vpop.f32.mrf.mxu0
      %v436 = vadd.f32 %v332, %v435
      %437 = vmatmul.bf16.gmra.mxu0 %v366
      %v438 = vpop.f32.mrf.mxu0
      %v439 = vadd.f32 %v332, %v438
      %v440 = vpop.f32.mrf.mxu0
      %v441 = vadd.f32 %v332, %v440
      %442 = vmatmul.bf16.gmra.mxu0 %v369
      %v443 = vpop.f32.mrf.mxu0
      %v444 = vadd.f32 %v332, %v443
      %v445 = vpop.f32.mrf.mxu0
      %v446 = vadd.f32 %v332, %v445
      %447 = vmatmul.bf16.gmra.mxu0 %v372
      %v448 = vpop.f32.mrf.mxu0
      %v449 = vadd.f32 %v332, %v448
      %v450 = vpop.f32.mrf.mxu0
      %v451 = vadd.f32 %v332, %v450
      %452 = vmatmul.bf16.gmra.mxu0 %v375
      %v453 = vpop.f32.mrf.mxu0
      %v454 = vadd.f32 %v332, %v453
      %v455 = vpop.f32.mrf.mxu0
      %v456 = vadd.f32 %v332, %v455
      %457 = vmatmul.bf16.gmra.mxu0 %v378
      %v458 = vpop.f32.mrf.mxu0
      %v459 = vadd.f32 %v332, %v458
      %v460 = vpop.f32.mrf.mxu0
      %v461 = vadd.f32 %v332, %v460
      %462 = vmatmul.bf16.gmra.mxu0 %v381
      %v463 = vpop.f32.mrf.mxu0
      %v464 = vadd.f32 %v332, %v463
      %v465 = vpop.f32.mrf.mxu0
      %v466 = vadd.f32 %v332, %v465
      %467 = vmatmul.bf16.gmra.mxu0 %v384
      %v468 = vpop.f32.mrf.mxu0
      %v469 = vadd.f32 %v332, %v468
      %v470 = vpop.f32.mrf.mxu0
      %v471 = vadd.f32 %v332, %v470
      %472 = vmatmul.bf16.gmra.mxu0 %v387
      %v473 = vpop.f32.mrf.mxu0
      %v474 = vadd.f32 %v332, %v473
      %v475 = vpop.f32.mrf.mxu0
      %v476 = vadd.f32 %v332, %v475
      %477 = vdwg.mxu0
      %v478 = vmax.f32 %v399, 0.0
      %v479 = vmax.f32 %v401, 0.0
      %v480 = vmax.f32 %v404, 0.0
      %v481 = vmax.f32 %v406, 0.0
      %v482 = vmax.f32 %v409, 0.0
      %v483 = vmax.f32 %v411, 0.0
      %v484 = vmax.f32 %v414, 0.0
      %v485 = vmax.f32 %v416, 0.0
      %v486 = vmax.f32 %v419, 0.0
      %v487 = vmax.f32 %v421, 0.0
      %v488 = vmax.f32 %v424, 0.0
      %v489 = vmax.f32 %v426, 0.0
      %v490 = vmax.f32 %v429, 0.0
      %v491 = vmax.f32 %v431, 0.0
      %v492 = vmax.f32 %v434, 0.0
      %v493 = vmax.f32 %v436, 0.0
      %v494 = vmax.f32 %v439, 0.0
      %v495 = vmax.f32 %v441, 0.0
      %v496 = vmax.f32 %v444, 0.0
      %v497 = vmax.f32 %v446, 0.0
      %v498 = vmax.f32 %v449, 0.0
      %v499 = vmax.f32 %v451, 0.0
      %v500 = vmax.f32 %v454, 0.0
      %v501 = vmax.f32 %v456, 0.0
      %v502 = vmax.f32 %v459, 0.0
      %v503 = vmax.f32 %v461, 0.0
      %v504 = vmax.f32 %v464, 0.0
      %v505 = vmax.f32 %v466, 0.0
      %v506 = vmax.f32 %v469, 0.0
      %v507 = vmax.f32 %v471, 0.0
      %v508 = vmax.f32 %v474, 0.0
      %v509 = vmax.f32 %v476, 0.0
      %vm510 = vcmask 31744
      %511 = vst.msk [vmem:[#allocation2] sm:$0xff] %vm510, 0.0
      %512 = vst.msk [vmem:[#allocation2 + $0x8] sm:$0xff] %vm510, 0.0
      %vm513 = vcmask 25600
      %514 = vst.msk [vmem:[#allocation2 + $0x10] sm:$0x3] %vm513, 0.0
      %515 = vst.msk [vmem:[#allocation2 + $0x18] sm:$0xff] %vm510, 0.0
      %516 = vst.msk [vmem:[#allocation2 + $0x20] sm:$0xff] %vm510, 0.0
      %517 = vst.msk [vmem:[#allocation2 + $0x28] sm:$0x3] %vm513, 0.0
      %518 = vst.msk [vmem:[#allocation2 + $0x30] sm:$0xff] %vm510, 0.0
      %519 = vst.msk [vmem:[#allocation2 + $0x38] sm:$0xff] %vm510, 0.0
      %520 = vst.msk [vmem:[#allocation2 + $0x40] sm:$0x3] %vm513, 0.0
      %521 = vst.msk [vmem:[#allocation2 + $0x48] sm:$0xff] %vm510, 0.0
      %522 = vst.msk [vmem:[#allocation2 + $0x50] sm:$0xff] %vm510, 0.0
      %523 = vst.msk [vmem:[#allocation2 + $0x58] sm:$0x3] %vm513, 0.0
      %524 = vst.msk [vmem:[#allocation2 + $0x60] sm:$0xff] %vm510, 0.0
      %525 = vst.msk [vmem:[#allocation2 + $0x68] sm:$0xff] %vm510, 0.0
      %526 = vst.msk [vmem:[#allocation2 + $0x70] sm:$0x3] %vm513, 0.0
      %527 = vst.msk [vmem:[#allocation2 + $0x78] sm:$0xff] %vm510, 0.0
      %528 = vst.msk [vmem:[#allocation2 + $0x80] sm:$0xff] %vm510, 0.0
      %529 = vst.msk [vmem:[#allocation2 + $0x88] sm:$0x3] %vm513, 0.0
      %530 = vst.msk [vmem:[#allocation2 + $0x90] sm:$0xff] %vm510, 0.0
      %531 = vst.msk [vmem:[#allocation2 + $0x98] sm:$0xff] %vm510, 0.0
      %532 = vst.msk [vmem:[#allocation2 + $0xa0] sm:$0x3] %vm513, 0.0
      %533 = vst.msk [vmem:[#allocation2 + $0xa8] sm:$0xff] %vm510, 0.0
      %534 = vst.msk [vmem:[#allocation2 + $0xb0] sm:$0xff] %vm510, 0.0
      %535 = vst.msk [vmem:[#allocation2 + $0xb8] sm:$0x3] %vm513, 0.0
      %536 = vst.msk [vmem:[#allocation2 + $0xc0] sm:$0xff] %vm510, 0.0
      %537 = vst.msk [vmem:[#allocation2 + $0xc8] sm:$0xff] %vm510, 0.0
      %538 = vst.msk [vmem:[#allocation2 + $0xd0] sm:$0x3] %vm513, 0.0
      %539 = vst.msk [vmem:[#allocation2 + $0xd8] sm:$0xff] %vm510, 0.0
      %540 = vst.msk [vmem:[#allocation2 + $0xe0] sm:$0xff] %vm510, 0.0
      %541 = vst.msk [vmem:[#allocation2 + $0xe8] sm:$0x3] %vm513, 0.0
      %542 = vst.msk [vmem:[#allocation2 + $0xf0] sm:$0xff] %vm510, 0.0
      %543 = vst.msk [vmem:[#allocation2 + $0xf8] sm:$0xff] %vm510, 0.0
      %544 = vst.msk [vmem:[#allocation2 + $0x100] sm:$0x3] %vm513, 0.0
      %545 = vst.msk [vmem:[#allocation2 + $0x108] sm:$0xff] %vm510, 0.0
      %546 = vst.msk [vmem:[#allocation2 + $0x110] sm:$0xff] %vm510, 0.0
      %547 = vst.msk [vmem:[#allocation2 + $0x118] sm:$0x3] %vm513, 0.0
      %548 = vst.msk [vmem:[#allocation2 + $0x120] sm:$0xff] %vm510, 0.0
      %549 = vst.msk [vmem:[#allocation2 + $0x128] sm:$0xff] %vm510, 0.0
      %550 = vst.msk [vmem:[#allocation2 + $0x130] sm:$0x3] %vm513, 0.0
      %551 = vst.msk [vmem:[#allocation2 + $0x138] sm:$0xff] %vm510, 0.0
      %552 = vst.msk [vmem:[#allocation2 + $0x140] sm:$0xff] %vm510, 0.0
      %553 = vst.msk [vmem:[#allocation2 + $0x148] sm:$0x3] %vm513, 0.0
      %554 = vst.msk [vmem:[#allocation2 + $0x150] sm:$0xff] %vm510, 0.0
      %555 = vst.msk [vmem:[#allocation2 + $0x158] sm:$0xff] %vm510, 0.0
      %556 = vst.msk [vmem:[#allocation2 + $0x160] sm:$0x3] %vm513, 0.0
      %557 = vst.msk [vmem:[#allocation2 + $0x168] sm:$0xff] %vm510, 0.0
      %558 = vst.msk [vmem:[#allocation2 + $0x170] sm:$0xff] %vm510, 0.0
      %559 = vst.msk [vmem:[#allocation2 + $0x178] sm:$0x3] %vm513, 0.0
      %560 = vst.msk [vmem:[#allocation2 + $0x180] sm:$0xff] %vm510, 0.0
      %561 = vst.msk [vmem:[#allocation2 + $0x188] sm:$0xff] %vm510, 0.0
      %562 = vst.msk [vmem:[#allocation2 + $0x190] sm:$0x3] %vm513, 0.0
      %563 = vst.msk [vmem:[#allocation2 + $0x198] sm:$0xff] %vm510, 0.0
      %564 = vst.msk [vmem:[#allocation2 + $0x1a0] sm:$0xff] %vm510, 0.0
      %565 = vst.msk [vmem:[#allocation2 + $0x1a8] sm:$0x3] %vm513, 0.0
      %s566 = scalar_lea.vmem [#allocation2], 24
      %567 = vst.msk [vmem:[%s566 + $0x1] sm:$0xff] %vm510, %v478
      %568 = vst.msk [vmem:[%s566 + $0x9] sm:$0xff] %vm510, %v479
      %569 = vst.msk [vmem:[%s566 + $0x19] sm:$0xff] %vm510, %v480
      %570 = vst.msk [vmem:[%s566 + $0x21] sm:$0xff] %vm510, %v481
      %571 = vst.msk [vmem:[%s566 + $0x31] sm:$0xff] %vm510, %v482
      %572 = vst.msk [vmem:[%s566 + $0x39] sm:$0xff] %vm510, %v483
      %573 = vst.msk [vmem:[%s566 + $0x49] sm:$0xff] %vm510, %v484
      %574 = vst.msk [vmem:[%s566 + $0x51] sm:$0xff] %vm510, %v485
      %575 = vst.msk [vmem:[%s566 + $0x61] sm:$0xff] %vm510, %v486
      %576 = vst.msk [vmem:[%s566 + $0x69] sm:$0xff] %vm510, %v487
      %577 = vst.msk [vmem:[%s566 + $0x79] sm:$0xff] %vm510, %v488
      %578 = vst.msk [vmem:[%s566 + $0x81] sm:$0xff] %vm510, %v489
      %579 = vst.msk [vmem:[%s566 + $0x91] sm:$0xff] %vm510, %v490
      %580 = vst.msk [vmem:[%s566 + $0x99] sm:$0xff] %vm510, %v491
      %581 = vst.msk [vmem:[%s566 + $0xa9] sm:$0xff] %vm510, %v492
      %582 = vst.msk [vmem:[%s566 + $0xb1] sm:$0xff] %vm510, %v493
      %583 = vst.msk [vmem:[%s566 + $0xc1] sm:$0xff] %vm510, %v494
      %584 = vst.msk [vmem:[%s566 + $0xc9] sm:$0xff] %vm510, %v495
      %585 = vst.msk [vmem:[%s566 + $0xd9] sm:$0xff] %vm510, %v496
      %586 = vst.msk [vmem:[%s566 + $0xe1] sm:$0xff] %vm510, %v497
      %587 = vst.msk [vmem:[%s566 + $0xf1] sm:$0xff] %vm510, %v498
      %588 = vst.msk [vmem:[%s566 + $0xf9] sm:$0xff] %vm510, %v499
      %589 = vst.msk [vmem:[%s566 + $0x109] sm:$0xff] %vm510, %v500
      %590 = vst.msk [vmem:[%s566 + $0x111] sm:$0xff] %vm510, %v501
      %591 = vst.msk [vmem:[%s566 + $0x121] sm:$0xff] %vm510, %v502
      %592 = vst.msk [vmem:[%s566 + $0x129] sm:$0xff] %vm510, %v503
      %593 = vst.msk [vmem:[%s566 + $0x139] sm:$0xff] %vm510, %v504
      %594 = vst.msk [vmem:[%s566 + $0x141] sm:$0xff] %vm510, %v505
      %595 = vst.msk [vmem:[%s566 + $0x151] sm:$0xff] %vm510, %v506
      %596 = vst.msk [vmem:[%s566 + $0x159] sm:$0xff] %vm510, %v507
      %597 = vst.msk [vmem:[%s566 + $0x169] sm:$0xff] %vm510, %v508
      %598 = vst.msk [vmem:[%s566 + $0x171] sm:$0xff] %vm510, %v509
      %v599 = vld [vmem:[%s4] sm:$0x1]
      %v601 = vperm.slane %v599, 0
      %v603 = vld [vmem:[#allocation2] sm:$0xff]
      %v604 = vld [vmem:[#allocation2 + $0x8] sm:$0xff]
      %v605 = vld [vmem:[#allocation2 + $0x18] sm:$0xff]
      %v606 = vld [vmem:[#allocation2 + $0x20] sm:$0xff]
      %v607 = vld [vmem:[#allocation2 + $0x30] sm:$0xff]
      %v608 = vld [vmem:[#allocation2 + $0x38] sm:$0xff]
      %v609 = vld [vmem:[#allocation2 + $0x48] sm:$0xff]
      %v610 = vld [vmem:[#allocation2 + $0x50] sm:$0xff]
      %v611 = vld [vmem:[#allocation2 + $0x60] sm:$0xff]
      %v612 = vld [vmem:[#allocation2 + $0x68] sm:$0xff]
      %v613 = vld [vmem:[#allocation2 + $0x78] sm:$0xff]
      %v614 = vld [vmem:[#allocation2 + $0x80] sm:$0xff]
      %v615 = vld [vmem:[#allocation2 + $0x90] sm:$0xff]
      %v616 = vld [vmem:[#allocation2 + $0x98] sm:$0xff]
      %v617 = vld [vmem:[#allocation2 + $0xa8] sm:$0xff]
      %v618 = vld [vmem:[#allocation2 + $0xb0] sm:$0xff]
      %v619 = vld [vmem:[#allocation2 + $0xc0] sm:$0xff]
      %v620 = vld [vmem:[#allocation2 + $0xc8] sm:$0xff]
      %v621 = vld [vmem:[#allocation2 + $0xd8] sm:$0xff]
      %v622 = vld [vmem:[#allocation2 + $0xe0] sm:$0xff]
      %v623 = vld [vmem:[#allocation2 + $0xf0] sm:$0xff]
      %v624 = vld [vmem:[#allocation2 + $0xf8] sm:$0xff]
      %v625 = vld [vmem:[#allocation2 + $0x108] sm:$0xff]
      %v626 = vld [vmem:[#allocation2 + $0x110] sm:$0xff]
      %v627 = vld [vmem:[#allocation2 + $0x120] sm:$0xff]
      %v628 = vld [vmem:[#allocation2 + $0x128] sm:$0xff]
      %v629 = vld [vmem:[#allocation2 + $0x138] sm:$0xff]
      %v630 = vld [vmem:[#allocation2 + $0x140] sm:$0xff]
      %v631 = vld [vmem:[#allocation2 + $0x150] sm:$0xff]
      %v632 = vld [vmem:[#allocation2 + $0x158] sm:$0xff]
      %v633 = vld [vmem:[#allocation2 + $0x168] sm:$0xff]
      %v634 = vld [vmem:[#allocation2 + $0x170] sm:$0xff]
      %v635 = vpack.c.bf16 %v604, %v603
      %v636 = vpack.c.bf16 %v606, %v605
      %v637 = vpack.c.bf16 %v608, %v607
      %v638 = vpack.c.bf16 %v610, %v609
      %v639 = vpack.c.bf16 %v612, %v611
      %v640 = vpack.c.bf16 %v614, %v613
      %v641 = vpack.c.bf16 %v616, %v615
      %v642 = vpack.c.bf16 %v618, %v617
      %v643 = vpack.c.bf16 %v620, %v619
      %v644 = vpack.c.bf16 %v622, %v621
      %v645 = vpack.c.bf16 %v624, %v623
      %v646 = vpack.c.bf16 %v626, %v625
      %v647 = vpack.c.bf16 %v628, %v627
      %v648 = vpack.c.bf16 %v630, %v629
      %v649 = vpack.c.bf16 %v632, %v631
      %v650 = vpack.c.bf16 %v634, %v633
      %v651 = vld [vmem:[%s3] sm:$0x3]
      %v653 = vsel %vm510, %v635, 0
      %v656 = vsel %vm510, %v636, 0
      %v659 = vsel %vm510, %v637, 0
      %v662 = vsel %vm510, %v638, 0
      %v665 = vsel %vm510, %v639, 0
      %v668 = vsel %vm510, %v640, 0
      %v671 = vsel %vm510, %v641, 0
      %v674 = vsel %vm510, %v642, 0
      %v677 = vsel %vm510, %v643, 0
      %v680 = vsel %vm510, %v644, 0
      %v683 = vsel %vm510, %v645, 0
      %v686 = vsel %vm510, %v646, 0
      %v689 = vsel %vm510, %v647, 0
      %v692 = vsel %vm510, %v648, 0
      %v695 = vsel %vm510, %v649, 0
      %v698 = vsel %vm510, %v650, 0
      %vm700 = vcmask 1041408
      %v702 = vsel %vm700, %v651, 0
      %704 = vmatpush.bf16.msra.mxu0 0
      %705 = vmatpush.bf16.msra.mxu0 0
      %706 = vmatpush.bf16.msra.mxu0 0
      %707 = vmatpush.bf16.msra.mxu0 0
      %708 = vmatpush.bf16.msra.mxu0 0
      %709 = vmatpush.bf16.msra.mxu0 0
      %710 = vmatpush.bf16.msra.mxu0 0
      %711 = vmatpush.bf16.msra.mxu0 %v702
      %712 = vmatmul.bf16.gmra.mxu0 %v653
      %v713 = vpop.f32.mrf.mxu0
      %v714 = vadd.f32 0.0, %v713
      %v715 = vpop.f32.mrf.mxu0
      %v716 = vadd.f32 0.0, %v715
      %717 = vmatmul.bf16.gmra.mxu0 %v656
      %v718 = vpop.f32.mrf.mxu0
      %v719 = vadd.f32 0.0, %v718
      %v720 = vpop.f32.mrf.mxu0
      %v721 = vadd.f32 0.0, %v720
      %722 = vmatmul.bf16.gmra.mxu0 %v659
      %v723 = vpop.f32.mrf.mxu0
      %v724 = vadd.f32 0.0, %v723
      %v725 = vpop.f32.mrf.mxu0
      %v726 = vadd.f32 0.0, %v725
      %727 = vmatmul.bf16.gmra.mxu0 %v662
      %v728 = vpop.f32.mrf.mxu0
      %v729 = vadd.f32 0.0, %v728
      %v730 = vpop.f32.mrf.mxu0
      %v731 = vadd.f32 0.0, %v730
      %732 = vmatmul.bf16.gmra.mxu0 %v665
      %v733 = vpop.f32.mrf.mxu0
      %v734 = vadd.f32 0.0, %v733
      %v735 = vpop.f32.mrf.mxu0
      %v736 = vadd.f32 0.0, %v735
      %737 = vmatmul.bf16.gmra.mxu0 %v668
      %v738 = vpop.f32.mrf.mxu0
      %v739 = vadd.f32 0.0, %v738
      %v740 = vpop.f32.mrf.mxu0
      %v741 = vadd.f32 0.0, %v740
      %742 = vmatmul.bf16.gmra.mxu0 %v671
      %v743 = vpop.f32.mrf.mxu0
      %v744 = vadd.f32 0.0, %v743
      %v745 = vpop.f32.mrf.mxu0
      %v746 = vadd.f32 0.0, %v745
      %747 = vmatmul.bf16.gmra.mxu0 %v674
      %v748 = vpop.f32.mrf.mxu0
      %v749 = vadd.f32 0.0, %v748
      %v750 = vpop.f32.mrf.mxu0
      %v751 = vadd.f32 0.0, %v750
      %752 = vmatmul.bf16.gmra.mxu0 %v677
      %v753 = vpop.f32.mrf.mxu0
      %v754 = vadd.f32 0.0, %v753
      %v755 = vpop.f32.mrf.mxu0
      %v756 = vadd.f32 0.0, %v755
      %757 = vmatmul.bf16.gmra.mxu0 %v680
      %v758 = vpop.f32.mrf.mxu0
      %v759 = vadd.f32 0.0, %v758
      %v760 = vpop.f32.mrf.mxu0
      %v761 = vadd.f32 0.0, %v760
      %762 = vmatmul.bf16.gmra.mxu0 %v683
      %v763 = vpop.f32.mrf.mxu0
      %v764 = vadd.f32 0.0, %v763
      %v765 = vpop.f32.mrf.mxu0
      %v766 = vadd.f32 0.0, %v765
      %767 = vmatmul.bf16.gmra.mxu0 %v686
      %v768 = vpop.f32.mrf.mxu0
      %v769 = vadd.f32 0.0, %v768
      %v770 = vpop.f32.mrf.mxu0
      %v771 = vadd.f32 0.0, %v770
      %772 = vmatmul.bf16.gmra.mxu0 %v689
      %v773 = vpop.f32.mrf.mxu0
      %v774 = vadd.f32 0.0, %v773
      %v775 = vpop.f32.mrf.mxu0
      %v776 = vadd.f32 0.0, %v775
      %777 = vmatmul.bf16.gmra.mxu0 %v692
      %v778 = vpop.f32.mrf.mxu0
      %v779 = vadd.f32 0.0, %v778
      %v780 = vpop.f32.mrf.mxu0
      %v781 = vadd.f32 0.0, %v780
      %782 = vmatmul.bf16.gmra.mxu0 %v695
      %v783 = vpop.f32.mrf.mxu0
      %v784 = vadd.f32 0.0, %v783
      %v785 = vpop.f32.mrf.mxu0
      %v786 = vadd.f32 0.0, %v785
      %787 = vmatmul.bf16.gmra.mxu0 %v698
      %v788 = vpop.f32.mrf.mxu0
      %v789 = vadd.f32 0.0, %v788
      %v790 = vpop.f32.mrf.mxu0
      %v791 = vadd.f32 0.0, %v790
      %792 = vdwg.mxu0
      %v793 = vadd.f32 %v601, %v714
      %v794 = vadd.f32 %v601, %v716
      %v795 = vadd.f32 %v601, %v719
      %v796 = vadd.f32 %v601, %v721
      %v797 = vadd.f32 %v601, %v724
      %v798 = vadd.f32 %v601, %v726
      %v799 = vadd.f32 %v601, %v729
      %v800 = vadd.f32 %v601, %v731
      %v801 = vadd.f32 %v601, %v734
      %v802 = vadd.f32 %v601, %v736
      %v803 = vadd.f32 %v601, %v739
      %v804 = vadd.f32 %v601, %v741
      %v805 = vadd.f32 %v601, %v744
      %v806 = vadd.f32 %v601, %v746
      %v807 = vadd.f32 %v601, %v749
      %v808 = vadd.f32 %v601, %v751
      %v809 = vadd.f32 %v601, %v754
      %v810 = vadd.f32 %v601, %v756
      %v811 = vadd.f32 %v601, %v759
      %v812 = vadd.f32 %v601, %v761
      %v813 = vadd.f32 %v601, %v764
      %v814 = vadd.f32 %v601, %v766
      %v815 = vadd.f32 %v601, %v769
      %v816 = vadd.f32 %v601, %v771
      %v817 = vadd.f32 %v601, %v774
      %v818 = vadd.f32 %v601, %v776
      %v819 = vadd.f32 %v601, %v779
      %v820 = vadd.f32 %v601, %v781
      %v821 = vadd.f32 %v601, %v784
      %v822 = vadd.f32 %v601, %v786
      %v823 = vadd.f32 %v601, %v789
      %v824 = vadd.f32 %v601, %v791
      %v825 = vld [vmem:[#allocation2 + $0x1] sm:$0xff]
      %v826 = vld [vmem:[#allocation2 + $0x9] sm:$0xff]
      %v827 = vld [vmem:[#allocation2 + $0x19] sm:$0xff]
      %v828 = vld [vmem:[#allocation2 + $0x21] sm:$0xff]
      %v829 = vld [vmem:[#allocation2 + $0x31] sm:$0xff]
      %v830 = vld [vmem:[#allocation2 + $0x39] sm:$0xff]
      %v831 = vld [vmem:[#allocation2 + $0x49] sm:$0xff]
      %v832 = vld [vmem:[#allocation2 + $0x51] sm:$0xff]
      %v833 = vld [vmem:[#allocation2 + $0x61] sm:$0xff]
      %v834 = vld [vmem:[#allocation2 + $0x69] sm:$0xff]
      %v835 = vld [vmem:[#allocation2 + $0x79] sm:$0xff]
      %v836 = vld [vmem:[#allocation2 + $0x81] sm:$0xff]
      %v837 = vld [vmem:[#allocation2 + $0x91] sm:$0xff]
      %v838 = vld [vmem:[#allocation2 + $0x99] sm:$0xff]
      %v839 = vld [vmem:[#allocation2 + $0xa9] sm:$0xff]
      %v840 = vld [vmem:[#allocation2 + $0xb1] sm:$0xff]
      %v841 = vld [vmem:[#allocation2 + $0xc1] sm:$0xff]
      %v842 = vld [vmem:[#allocation2 + $0xc9] sm:$0xff]
      %v843 = vld [vmem:[#allocation2 + $0xd9] sm:$0xff]
      %v844 = vld [vmem:[#allocation2 + $0xe1] sm:$0xff]
      %v845 = vld [vmem:[#allocation2 + $0xf1] sm:$0xff]
      %v846 = vld [vmem:[#allocation2 + $0xf9] sm:$0xff]
      %v847 = vld [vmem:[#allocation2 + $0x109] sm:$0xff]
      %v848 = vld [vmem:[#allocation2 + $0x111] sm:$0xff]
      %v849 = vld [vmem:[#allocation2 + $0x121] sm:$0xff]
      %v850 = vld [vmem:[#allocation2 + $0x129] sm:$0xff]
      %v851 = vld [vmem:[#allocation2 + $0x139] sm:$0xff]
      %v852 = vld [vmem:[#allocation2 + $0x141] sm:$0xff]
      %v853 = vld [vmem:[#allocation2 + $0x151] sm:$0xff]
      %v854 = vld [vmem:[#allocation2 + $0x159] sm:$0xff]
      %v855 = vld [vmem:[#allocation2 + $0x169] sm:$0xff]
      %v856 = vld [vmem:[#allocation2 + $0x171] sm:$0xff]
      %v857 = vpack.c.bf16 %v826, %v825
      %v858 = vpack.c.bf16 %v828, %v827
      %v859 = vpack.c.bf16 %v830, %v829
      %v860 = vpack.c.bf16 %v832, %v831
      %v861 = vpack.c.bf16 %v834, %v833
      %v862 = vpack.c.bf16 %v836, %v835
      %v863 = vpack.c.bf16 %v838, %v837
      %v864 = vpack.c.bf16 %v840, %v839
      %v865 = vpack.c.bf16 %v842, %v841
      %v866 = vpack.c.bf16 %v844, %v843
      %v867 = vpack.c.bf16 %v846, %v845
      %v868 = vpack.c.bf16 %v848, %v847
      %v869 = vpack.c.bf16 %v850, %v849
      %v870 = vpack.c.bf16 %v852, %v851
      %v871 = vpack.c.bf16 %v854, %v853
      %v872 = vpack.c.bf16 %v856, %v855
      %s873 = scalar_lea.vmem %s3, 2
      %v874 = vld [vmem:[%s873] sm:$0x3]
      %v876 = vsel %vm510, %v857, 0
      %v879 = vsel %vm510, %v858, 0
      %v882 = vsel %vm510, %v859, 0
      %v885 = vsel %vm510, %v860, 0
      %v888 = vsel %vm510, %v861, 0
      %v891 = vsel %vm510, %v862, 0
      %v894 = vsel %vm510, %v863, 0
      %v897 = vsel %vm510, %v864, 0
      %v900 = vsel %vm510, %v865, 0
      %v903 = vsel %vm510, %v866, 0
      %v906 = vsel %vm510, %v867, 0
      %v909 = vsel %vm510, %v868, 0
      %v912 = vsel %vm510, %v869, 0
      %v915 = vsel %vm510, %v870, 0
      %v918 = vsel %vm510, %v871, 0
      %v921 = vsel %vm510, %v872, 0
      %v924 = vsel %vm700, %v874, 0
      %926 = vmatpush.bf16.msra.mxu0 0
      %927 = vmatpush.bf16.msra.mxu0 0
      %928 = vmatpush.bf16.msra.mxu0 0
      %929 = vmatpush.bf16.msra.mxu0 0
      %930 = vmatpush.bf16.msra.mxu0 0
      %931 = vmatpush.bf16.msra.mxu0 0
      %932 = vmatpush.bf16.msra.mxu0 0
      %933 = vmatpush.bf16.msra.mxu0 %v924
      %934 = vmatmul.bf16.gmra.mxu0 %v876
      %v935 = vpop.f32.mrf.mxu0
      %v936 = vadd.f32 0.0, %v935
      %v937 = vpop.f32.mrf.mxu0
      %v938 = vadd.f32 0.0, %v937
      %939 = vmatmul.bf16.gmra.mxu0 %v879
      %v940 = vpop.f32.mrf.mxu0
      %v941 = vadd.f32 0.0, %v940
      %v942 = vpop.f32.mrf.mxu0
      %v943 = vadd.f32 0.0, %v942
      %944 = vmatmul.bf16.gmra.mxu0 %v882
      %v945 = vpop.f32.mrf.mxu0
      %v946 = vadd.f32 0.0, %v945
      %v947 = vpop.f32.mrf.mxu0
      %v948 = vadd.f32 0.0, %v947
      %949 = vmatmul.bf16.gmra.mxu0 %v885
      %v950 = vpop.f32.mrf.mxu0
      %v951 = vadd.f32 0.0, %v950
      %v952 = vpop.f32.mrf.mxu0
      %v953 = vadd.f32 0.0, %v952
      %954 = vmatmul.bf16.gmra.mxu0 %v888
      %v955 = vpop.f32.mrf.mxu0
      %v956 = vadd.f32 0.0, %v955
      %v957 = vpop.f32.mrf.mxu0
      %v958 = vadd.f32 0.0, %v957
      %959 = vmatmul.bf16.gmra.mxu0 %v891
      %v960 = vpop.f32.mrf.mxu0
      %v961 = vadd.f32 0.0, %v960
      %v962 = vpop.f32.mrf.mxu0
      %v963 = vadd.f32 0.0, %v962
      %964 = vmatmul.bf16.gmra.mxu0 %v894
      %v965 = vpop.f32.mrf.mxu0
      %v966 = vadd.f32 0.0, %v965
      %v967 = vpop.f32.mrf.mxu0
      %v968 = vadd.f32 0.0, %v967
      %969 = vmatmul.bf16.gmra.mxu0 %v897
      %v970 = vpop.f32.mrf.mxu0
      %v971 = vadd.f32 0.0, %v970
      %v972 = vpop.f32.mrf.mxu0
      %v973 = vadd.f32 0.0, %v972
      %974 = vmatmul.bf16.gmra.mxu0 %v900
      %v975 = vpop.f32.mrf.mxu0
      %v976 = vadd.f32 0.0, %v975
      %v977 = vpop.f32.mrf.mxu0
      %v978 = vadd.f32 0.0, %v977
      %979 = vmatmul.bf16.gmra.mxu0 %v903
      %v980 = vpop.f32.mrf.mxu0
      %v981 = vadd.f32 0.0, %v980
      %v982 = vpop.f32.mrf.mxu0
      %v983 = vadd.f32 0.0, %v982
      %984 = vmatmul.bf16.gmra.mxu0 %v906
      %v985 = vpop.f32.mrf.mxu0
      %v986 = vadd.f32 0.0, %v985
      %v987 = vpop.f32.mrf.mxu0
      %v988 = vadd.f32 0.0, %v987
      %989 = vmatmul.bf16.gmra.mxu0 %v909
      %v990 = vpop.f32.mrf.mxu0
      %v991 = vadd.f32 0.0, %v990
      %v992 = vpop.f32.mrf.mxu0
      %v993 = vadd.f32 0.0, %v992
      %994 = vmatmul.bf16.gmra.mxu0 %v912
      %v995 = vpop.f32.mrf.mxu0
      %v996 = vadd.f32 0.0, %v995
      %v997 = vpop.f32.mrf.mxu0
      %v998 = vadd.f32 0.0, %v997
      %999 = vmatmul.bf16.gmra.mxu0 %v915
      %v1000 = vpop.f32.mrf.mxu0
      %v1001 = vadd.f32 0.0, %v1000
      %v1002 = vpop.f32.mrf.mxu0
      %v1003 = vadd.f32 0.0, %v1002
      %1004 = vmatmul.bf16.gmra.mxu0 %v918
      %v1005 = vpop.f32.mrf.mxu0
      %v1006 = vadd.f32 0.0, %v1005
      %v1007 = vpop.f32.mrf.mxu0
      %v1008 = vadd.f32 0.0, %v1007
      %1009 = vmatmul.bf16.gmra.mxu0 %v921
      %v1010 = vpop.f32.mrf.mxu0
      %v1011 = vadd.f32 0.0, %v1010
      %v1012 = vpop.f32.mrf.mxu0
      %v1013 = vadd.f32 0.0, %v1012
      %1014 = vdwg.mxu0
      %v1015 = vadd.f32 %v793, %v936
      %v1016 = vadd.f32 %v794, %v938
      %v1017 = vadd.f32 %v795, %v941
      %v1018 = vadd.f32 %v796, %v943
      %v1019 = vadd.f32 %v797, %v946
      %v1020 = vadd.f32 %v798, %v948
      %v1021 = vadd.f32 %v799, %v951
      %v1022 = vadd.f32 %v800, %v953
      %v1023 = vadd.f32 %v801, %v956
      %v1024 = vadd.f32 %v802, %v958
      %v1025 = vadd.f32 %v803, %v961
      %v1026 = vadd.f32 %v804, %v963
      %v1027 = vadd.f32 %v805, %v966
      %v1028 = vadd.f32 %v806, %v968
      %v1029 = vadd.f32 %v807, %v971
      %v1030 = vadd.f32 %v808, %v973
      %v1031 = vadd.f32 %v809, %v976
      %v1032 = vadd.f32 %v810, %v978
      %v1033 = vadd.f32 %v811, %v981
      %v1034 = vadd.f32 %v812, %v983
      %v1035 = vadd.f32 %v813, %v986
      %v1036 = vadd.f32 %v814, %v988
      %v1037 = vadd.f32 %v815, %v991
      %v1038 = vadd.f32 %v816, %v993
      %v1039 = vadd.f32 %v817, %v996
      %v1040 = vadd.f32 %v818, %v998
      %v1041 = vadd.f32 %v819, %v1001
      %v1042 = vadd.f32 %v820, %v1003
      %v1043 = vadd.f32 %v821, %v1006
      %v1044 = vadd.f32 %v822, %v1008
      %v1045 = vadd.f32 %v823, %v1011
      %v1046 = vadd.f32 %v824, %v1013
      %v1047 = vld [vmem:[#allocation2 + $0x2] sm:$0xff]
      %v1048 = vld [vmem:[#allocation2 + $0xa] sm:$0xff]
      %v1049 = vld [vmem:[#allocation2 + $0x1a] sm:$0xff]
      %v1050 = vld [vmem:[#allocation2 + $0x22] sm:$0xff]
      %v1051 = vld [vmem:[#allocation2 + $0x32] sm:$0xff]
      %v1052 = vld [vmem:[#allocation2 + $0x3a] sm:$0xff]
      %v1053 = vld [vmem:[#allocation2 + $0x4a] sm:$0xff]
      %v1054 = vld [vmem:[#allocation2 + $0x52] sm:$0xff]
      %v1055 = vld [vmem:[#allocation2 + $0x62] sm:$0xff]
      %v1056 = vld [vmem:[#allocation2 + $0x6a] sm:$0xff]
      %v1057 = vld [vmem:[#allocation2 + $0x7a] sm:$0xff]
      %v1058 = vld [vmem:[#allocation2 + $0x82] sm:$0xff]
      %v1059 = vld [vmem:[#allocation2 + $0x92] sm:$0xff]
      %v1060 = vld [vmem:[#allocation2 + $0x9a] sm:$0xff]
      %v1061 = vld [vmem:[#allocation2 + $0xaa] sm:$0xff]
      %v1062 = vld [vmem:[#allocation2 + $0xb2] sm:$0xff]
      %v1063 = vld [vmem:[#allocation2 + $0xc2] sm:$0xff]
      %v1064 = vld [vmem:[#allocation2 + $0xca] sm:$0xff]
      %v1065 = vld [vmem:[#allocation2 + $0xda] sm:$0xff]
      %v1066 = vld [vmem:[#allocation2 + $0xe2] sm:$0xff]
      %v1067 = vld [vmem:[#allocation2 + $0xf2] sm:$0xff]
      %v1068 = vld [vmem:[#allocation2 + $0xfa] sm:$0xff]
      %v1069 = vld [vmem:[#allocation2 + $0x10a] sm:$0xff]
      %v1070 = vld [vmem:[#allocation2 + $0x112] sm:$0xff]
      %v1071 = vld [vmem:[#allocation2 + $0x122] sm:$0xff]
      %v1072 = vld [vmem:[#allocation2 + $0x12a] sm:$0xff]
      %v1073 = vld [vmem:[#allocation2 + $0x13a] sm:$0xff]
      %v1074 = vld [vmem:[#allocation2 + $0x142] sm:$0xff]
      %v1075 = vld [vmem:[#allocation2 + $0x152] sm:$0xff]
      %v1076 = vld [vmem:[#allocation2 + $0x15a] sm:$0xff]
      %v1077 = vld [vmem:[#allocation2 + $0x16a] sm:$0xff]
      %v1078 = vld [vmem:[#allocation2 + $0x172] sm:$0xff]
      %v1079 = vpack.c.bf16 %v1048, %v1047
      %v1080 = vpack.c.bf16 %v1050, %v1049
      %v1081 = vpack.c.bf16 %v1052, %v1051
      %v1082 = vpack.c.bf16 %v1054, %v1053
      %v1083 = vpack.c.bf16 %v1056, %v1055
      %v1084 = vpack.c.bf16 %v1058, %v1057
      %v1085 = vpack.c.bf16 %v1060, %v1059
      %v1086 = vpack.c.bf16 %v1062, %v1061
      %v1087 = vpack.c.bf16 %v1064, %v1063
      %v1088 = vpack.c.bf16 %v1066, %v1065
      %v1089 = vpack.c.bf16 %v1068, %v1067
      %v1090 = vpack.c.bf16 %v1070, %v1069
      %v1091 = vpack.c.bf16 %v1072, %v1071
      %v1092 = vpack.c.bf16 %v1074, %v1073
      %v1093 = vpack.c.bf16 %v1076, %v1075
      %v1094 = vpack.c.bf16 %v1078, %v1077
      %s1095 = scalar_lea.vmem %s3, 4
      %v1096 = vld [vmem:[%s1095] sm:$0x3]
      %v1098 = vsel %vm510, %v1079, 0
      %v1101 = vsel %vm510, %v1080, 0
      %v1104 = vsel %vm510, %v1081, 0
      %v1107 = vsel %vm510, %v1082, 0
      %v1110 = vsel %vm510, %v1083, 0
      %v1113 = vsel %vm510, %v1084, 0
      %v1116 = vsel %vm510, %v1085, 0
      %v1119 = vsel %vm510, %v1086, 0
      %v1122 = vsel %vm510, %v1087, 0
      %v1125 = vsel %vm510, %v1088, 0
      %v1128 = vsel %vm510, %v1089, 0
      %v1131 = vsel %vm510, %v1090, 0
      %v1134 = vsel %vm510, %v1091, 0
      %v1137 = vsel %vm510, %v1092, 0
      %v1140 = vsel %vm510, %v1093, 0
      %v1143 = vsel %vm510, %v1094, 0
      %v1146 = vsel %vm700, %v1096, 0
      %1148 = vmatpush.bf16.msra.mxu0 0
      %1149 = vmatpush.bf16.msra.mxu0 0
      %1150 = vmatpush.bf16.msra.mxu0 0
      %1151 = vmatpush.bf16.msra.mxu0 0
      %1152 = vmatpush.bf16.msra.mxu0 0
      %1153 = vmatpush.bf16.msra.mxu0 0
      %1154 = vmatpush.bf16.msra.mxu0 0
      %1155 = vmatpush.bf16.msra.mxu0 %v1146
      %1156 = vmatmul.bf16.gmra.mxu0 %v1098
      %v1157 = vpop.f32.mrf.mxu0
      %v1158 = vadd.f32 0.0, %v1157
      %v1159 = vpop.f32.mrf.mxu0
      %v1160 = vadd.f32 0.0, %v1159
      %1161 = vmatmul.bf16.gmra.mxu0 %v1101
      %v1162 = vpop.f32.mrf.mxu0
      %v1163 = vadd.f32 0.0, %v1162
      %v1164 = vpop.f32.mrf.mxu0
      %v1165 = vadd.f32 0.0, %v1164
      %1166 = vmatmul.bf16.gmra.mxu0 %v1104
      %v1167 = vpop.f32.mrf.mxu0
      %v1168 = vadd.f32 0.0, %v1167
      %v1169 = vpop.f32.mrf.mxu0
      %v1170 = vadd.f32 0.0, %v1169
      %1171 = vmatmul.bf16.gmra.mxu0 %v1107
      %v1172 = vpop.f32.mrf.mxu0
      %v1173 = vadd.f32 0.0, %v1172
      %v1174 = vpop.f32.mrf.mxu0
      %v1175 = vadd.f32 0.0, %v1174
      %1176 = vmatmul.bf16.gmra.mxu0 %v1110
      %v1177 = vpop.f32.mrf.mxu0
      %v1178 = vadd.f32 0.0, %v1177
      %v1179 = vpop.f32.mrf.mxu0
      %v1180 = vadd.f32 0.0, %v1179
      %1181 = vmatmul.bf16.gmra.mxu0 %v1113
      %v1182 = vpop.f32.mrf.mxu0
      %v1183 = vadd.f32 0.0, %v1182
      %v1184 = vpop.f32.mrf.mxu0
      %v1185 = vadd.f32 0.0, %v1184
      %1186 = vmatmul.bf16.gmra.mxu0 %v1116
      %v1187 = vpop.f32.mrf.mxu0
      %v1188 = vadd.f32 0.0, %v1187
      %v1189 = vpop.f32.mrf.mxu0
      %v1190 = vadd.f32 0.0, %v1189
      %1191 = vmatmul.bf16.gmra.mxu0 %v1119
      %v1192 = vpop.f32.mrf.mxu0
      %v1193 = vadd.f32 0.0, %v1192
      %v1194 = vpop.f32.mrf.mxu0
      %v1195 = vadd.f32 0.0, %v1194
      %1196 = vmatmul.bf16.gmra.mxu0 %v1122
      %v1197 = vpop.f32.mrf.mxu0
      %v1198 = vadd.f32 0.0, %v1197
      %v1199 = vpop.f32.mrf.mxu0
      %v1200 = vadd.f32 0.0, %v1199
      %1201 = vmatmul.bf16.gmra.mxu0 %v1125
      %v1202 = vpop.f32.mrf.mxu0
      %v1203 = vadd.f32 0.0, %v1202
      %v1204 = vpop.f32.mrf.mxu0
      %v1205 = vadd.f32 0.0, %v1204
      %1206 = vmatmul.bf16.gmra.mxu0 %v1128
      %v1207 = vpop.f32.mrf.mxu0
      %v1208 = vadd.f32 0.0, %v1207
      %v1209 = vpop.f32.mrf.mxu0
      %v1210 = vadd.f32 0.0, %v1209
      %1211 = vmatmul.bf16.gmra.mxu0 %v1131
      %v1212 = vpop.f32.mrf.mxu0
      %v1213 = vadd.f32 0.0, %v1212
      %v1214 = vpop.f32.mrf.mxu0
      %v1215 = vadd.f32 0.0, %v1214
      %1216 = vmatmul.bf16.gmra.mxu0 %v1134
      %v1217 = vpop.f32.mrf.mxu0
      %v1218 = vadd.f32 0.0, %v1217
      %v1219 = vpop.f32.mrf.mxu0
      %v1220 = vadd.f32 0.0, %v1219
      %1221 = vmatmul.bf16.gmra.mxu0 %v1137
      %v1222 = vpop.f32.mrf.mxu0
      %v1223 = vadd.f32 0.0, %v1222
      %v1224 = vpop.f32.mrf.mxu0
      %v1225 = vadd.f32 0.0, %v1224
      %1226 = vmatmul.bf16.gmra.mxu0 %v1140
      %v1227 = vpop.f32.mrf.mxu0
      %v1228 = vadd.f32 0.0, %v1227
      %v1229 = vpop.f32.mrf.mxu0
      %v1230 = vadd.f32 0.0, %v1229
      %1231 = vmatmul.bf16.gmra.mxu0 %v1143
      %v1232 = vpop.f32.mrf.mxu0
      %v1233 = vadd.f32 0.0, %v1232
      %v1234 = vpop.f32.mrf.mxu0
      %v1235 = vadd.f32 0.0, %v1234
      %1236 = vdwg.mxu0
      %v1237 = vadd.f32 %v1015, %v1158
      %v1238 = vadd.f32 %v1016, %v1160
      %v1239 = vadd.f32 %v1017, %v1163
      %v1240 = vadd.f32 %v1018, %v1165
      %v1241 = vadd.f32 %v1019, %v1168
      %v1242 = vadd.f32 %v1020, %v1170
      %v1243 = vadd.f32 %v1021, %v1173
      %v1244 = vadd.f32 %v1022, %v1175
      %v1245 = vadd.f32 %v1023, %v1178
      %v1246 = vadd.f32 %v1024, %v1180
      %v1247 = vadd.f32 %v1025, %v1183
      %v1248 = vadd.f32 %v1026, %v1185
      %v1249 = vadd.f32 %v1027, %v1188
      %v1250 = vadd.f32 %v1028, %v1190
      %v1251 = vadd.f32 %v1029, %v1193
      %v1252 = vadd.f32 %v1030, %v1195
      %v1253 = vadd.f32 %v1031, %v1198
      %v1254 = vadd.f32 %v1032, %v1200
      %v1255 = vadd.f32 %v1033, %v1203
      %v1256 = vadd.f32 %v1034, %v1205
      %v1257 = vadd.f32 %v1035, %v1208
      %v1258 = vadd.f32 %v1036, %v1210
      %v1259 = vadd.f32 %v1037, %v1213
      %v1260 = vadd.f32 %v1038, %v1215
      %v1261 = vadd.f32 %v1039, %v1218
      %v1262 = vadd.f32 %v1040, %v1220
      %v1263 = vadd.f32 %v1041, %v1223
      %v1264 = vadd.f32 %v1042, %v1225
      %v1265 = vadd.f32 %v1043, %v1228
      %v1266 = vadd.f32 %v1044, %v1230
      %v1267 = vadd.f32 %v1045, %v1233
      %v1268 = vadd.f32 %v1046, %v1235
      %v1269 = vld [vmem:[%s566] sm:$0xff]
      %v1270 = vld [vmem:[%s566 + $0x8] sm:$0xff]
      %v1271 = vld [vmem:[%s566 + $0x18] sm:$0xff]
      %v1272 = vld [vmem:[%s566 + $0x20] sm:$0xff]
      %v1273 = vld [vmem:[%s566 + $0x30] sm:$0xff]
      %v1274 = vld [vmem:[%s566 + $0x38] sm:$0xff]
      %v1275 = vld [vmem:[%s566 + $0x48] sm:$0xff]
      %v1276 = vld [vmem:[%s566 + $0x50] sm:$0xff]
      %v1277 = vld [vmem:[%s566 + $0x60] sm:$0xff]
      %v1278 = vld [vmem:[%s566 + $0x68] sm:$0xff]
      %v1279 = vld [vmem:[%s566 + $0x78] sm:$0xff]
      %v1280 = vld [vmem:[%s566 + $0x80] sm:$0xff]
      %v1281 = vld [vmem:[%s566 + $0x90] sm:$0xff]
      %v1282 = vld [vmem:[%s566 + $0x98] sm:$0xff]
      %v1283 = vld [vmem:[%s566 + $0xa8] sm:$0xff]
      %v1284 = vld [vmem:[%s566 + $0xb0] sm:$0xff]
      %v1285 = vld [vmem:[%s566 + $0xc0] sm:$0xff]
      %v1286 = vld [vmem:[%s566 + $0xc8] sm:$0xff]
      %v1287 = vld [vmem:[%s566 + $0xd8] sm:$0xff]
      %v1288 = vld [vmem:[%s566 + $0xe0] sm:$0xff]
      %v1289 = vld [vmem:[%s566 + $0xf0] sm:$0xff]
      %v1290 = vld [vmem:[%s566 + $0xf8] sm:$0xff]
      %v1291 = vld [vmem:[%s566 + $0x108] sm:$0xff]
      %v1292 = vld [vmem:[%s566 + $0x110] sm:$0xff]
      %v1293 = vld [vmem:[%s566 + $0x120] sm:$0xff]
      %v1294 = vld [vmem:[%s566 + $0x128] sm:$0xff]
      %v1295 = vld [vmem:[%s566 + $0x138] sm:$0xff]
      %v1296 = vld [vmem:[%s566 + $0x140] sm:$0xff]
      %v1297 = vld [vmem:[%s566 + $0x150] sm:$0xff]
      %v1298 = vld [vmem:[%s566 + $0x158] sm:$0xff]
      %v1299 = vld [vmem:[%s566 + $0x168] sm:$0xff]
      %v1300 = vld [vmem:[%s566 + $0x170] sm:$0xff]
      %v1301 = vpack.c.bf16 %v1270, %v1269
      %v1302 = vpack.c.bf16 %v1272, %v1271
      %v1303 = vpack.c.bf16 %v1274, %v1273
      %v1304 = vpack.c.bf16 %v1276, %v1275
      %v1305 = vpack.c.bf16 %v1278, %v1277
      %v1306 = vpack.c.bf16 %v1280, %v1279
      %v1307 = vpack.c.bf16 %v1282, %v1281
      %v1308 = vpack.c.bf16 %v1284, %v1283
      %v1309 = vpack.c.bf16 %v1286, %v1285
      %v1310 = vpack.c.bf16 %v1288, %v1287
      %v1311 = vpack.c.bf16 %v1290, %v1289
      %v1312 = vpack.c.bf16 %v1292, %v1291
      %v1313 = vpack.c.bf16 %v1294, %v1293
      %v1314 = vpack.c.bf16 %v1296, %v1295
      %v1315 = vpack.c.bf16 %v1298, %v1297
      %v1316 = vpack.c.bf16 %v1300, %v1299
      %s1317 = scalar_lea.vmem %s3, 6
      %v1318 = vld [vmem:[%s1317] sm:$0x3]
      %v1320 = vsel %vm510, %v1301, 0
      %v1323 = vsel %vm510, %v1302, 0
      %v1326 = vsel %vm510, %v1303, 0
      %v1329 = vsel %vm510, %v1304, 0
      %v1332 = vsel %vm510, %v1305, 0
      %v1335 = vsel %vm510, %v1306, 0
      %v1338 = vsel %vm510, %v1307, 0
      %v1341 = vsel %vm510, %v1308, 0
      %v1344 = vsel %vm510, %v1309, 0
      %v1347 = vsel %vm510, %v1310, 0
      %v1350 = vsel %vm510, %v1311, 0
      %v1353 = vsel %vm510, %v1312, 0
      %v1356 = vsel %vm510, %v1313, 0
      %v1359 = vsel %vm510, %v1314, 0
      %v1362 = vsel %vm510, %v1315, 0
      %v1365 = vsel %vm510, %v1316, 0
      %v1368 = vsel %vm700, %v1318, 0
      %1370 = vmatpush.bf16.msra.mxu0 0
      %1371 = vmatpush.bf16.msra.mxu0 0
      %1372 = vmatpush.bf16.msra.mxu0 0
      %1373 = vmatpush.bf16.msra.mxu0 0
      %1374 = vmatpush.bf16.msra.mxu0 0
      %1375 = vmatpush.bf16.msra.mxu0 0
      %1376 = vmatpush.bf16.msra.mxu0 0
      %1377 = vmatpush.bf16.msra.mxu0 %v1368
      %1378 = vmatmul.bf16.gmra.mxu0 %v1320
      %v1379 = vpop.f32.mrf.mxu0
      %v1380 = vadd.f32 0.0, %v1379
      %v1381 = vpop.f32.mrf.mxu0
      %v1382 = vadd.f32 0.0, %v1381
      %1383 = vmatmul.bf16.gmra.mxu0 %v1323
      %v1384 = vpop.f32.mrf.mxu0
      %v1385 = vadd.f32 0.0, %v1384
      %v1386 = vpop.f32.mrf.mxu0
      %v1387 = vadd.f32 0.0, %v1386
      %1388 = vmatmul.bf16.gmra.mxu0 %v1326
      %v1389 = vpop.f32.mrf.mxu0
      %v1390 = vadd.f32 0.0, %v1389
      %v1391 = vpop.f32.mrf.mxu0
      %v1392 = vadd.f32 0.0, %v1391
      %1393 = vmatmul.bf16.gmra.mxu0 %v1329
      %v1394 = vpop.f32.mrf.mxu0
      %v1395 = vadd.f32 0.0, %v1394
      %v1396 = vpop.f32.mrf.mxu0
      %v1397 = vadd.f32 0.0, %v1396
      %1398 = vmatmul.bf16.gmra.mxu0 %v1332
      %v1399 = vpop.f32.mrf.mxu0
      %v1400 = vadd.f32 0.0, %v1399
      %v1401 = vpop.f32.mrf.mxu0
      %v1402 = vadd.f32 0.0, %v1401
      %1403 = vmatmul.bf16.gmra.mxu0 %v1335
      %v1404 = vpop.f32.mrf.mxu0
      %v1405 = vadd.f32 0.0, %v1404
      %v1406 = vpop.f32.mrf.mxu0
      %v1407 = vadd.f32 0.0, %v1406
      %1408 = vmatmul.bf16.gmra.mxu0 %v1338
      %v1409 = vpop.f32.mrf.mxu0
      %v1410 = vadd.f32 0.0, %v1409
      %v1411 = vpop.f32.mrf.mxu0
      %v1412 = vadd.f32 0.0, %v1411
      %1413 = vmatmul.bf16.gmra.mxu0 %v1341
      %v1414 = vpop.f32.mrf.mxu0
      %v1415 = vadd.f32 0.0, %v1414
      %v1416 = vpop.f32.mrf.mxu0
      %v1417 = vadd.f32 0.0, %v1416
      %1418 = vmatmul.bf16.gmra.mxu0 %v1344
      %v1419 = vpop.f32.mrf.mxu0
      %v1420 = vadd.f32 0.0, %v1419
      %v1421 = vpop.f32.mrf.mxu0
      %v1422 = vadd.f32 0.0, %v1421
      %1423 = vmatmul.bf16.gmra.mxu0 %v1347
      %v1424 = vpop.f32.mrf.mxu0
      %v1425 = vadd.f32 0.0, %v1424
      %v1426 = vpop.f32.mrf.mxu0
      %v1427 = vadd.f32 0.0, %v1426
      %1428 = vmatmul.bf16.gmra.mxu0 %v1350
      %v1429 = vpop.f32.mrf.mxu0
      %v1430 = vadd.f32 0.0, %v1429
      %v1431 = vpop.f32.mrf.mxu0
      %v1432 = vadd.f32 0.0, %v1431
      %1433 = vmatmul.bf16.gmra.mxu0 %v1353
      %v1434 = vpop.f32.mrf.mxu0
      %v1435 = vadd.f32 0.0, %v1434
      %v1436 = vpop.f32.mrf.mxu0
      %v1437 = vadd.f32 0.0, %v1436
      %1438 = vmatmul.bf16.gmra.mxu0 %v1356
      %v1439 = vpop.f32.mrf.mxu0
      %v1440 = vadd.f32 0.0, %v1439
      %v1441 = vpop.f32.mrf.mxu0
      %v1442 = vadd.f32 0.0, %v1441
      %1443 = vmatmul.bf16.gmra.mxu0 %v1359
      %v1444 = vpop.f32.mrf.mxu0
      %v1445 = vadd.f32 0.0, %v1444
      %v1446 = vpop.f32.mrf.mxu0
      %v1447 = vadd.f32 0.0, %v1446
      %1448 = vmatmul.bf16.gmra.mxu0 %v1362
      %v1449 = vpop.f32.mrf.mxu0
      %v1450 = vadd.f32 0.0, %v1449
      %v1451 = vpop.f32.mrf.mxu0
      %v1452 = vadd.f32 0.0, %v1451
      %1453 = vmatmul.bf16.gmra.mxu0 %v1365
      %v1454 = vpop.f32.mrf.mxu0
      %v1455 = vadd.f32 0.0, %v1454
      %v1456 = vpop.f32.mrf.mxu0
      %v1457 = vadd.f32 0.0, %v1456
      %1458 = vdwg.mxu0
      %v1459 = vadd.f32 %v1237, %v1380
      %v1460 = vadd.f32 %v1238, %v1382
      %v1461 = vadd.f32 %v1239, %v1385
      %v1462 = vadd.f32 %v1240, %v1387
      %v1463 = vadd.f32 %v1241, %v1390
      %v1464 = vadd.f32 %v1242, %v1392
      %v1465 = vadd.f32 %v1243, %v1395
      %v1466 = vadd.f32 %v1244, %v1397
      %v1467 = vadd.f32 %v1245, %v1400
      %v1468 = vadd.f32 %v1246, %v1402
      %v1469 = vadd.f32 %v1247, %v1405
      %v1470 = vadd.f32 %v1248, %v1407
      %v1471 = vadd.f32 %v1249, %v1410
      %v1472 = vadd.f32 %v1250, %v1412
      %v1473 = vadd.f32 %v1251, %v1415
      %v1474 = vadd.f32 %v1252, %v1417
      %v1475 = vadd.f32 %v1253, %v1420
      %v1476 = vadd.f32 %v1254, %v1422
      %v1477 = vadd.f32 %v1255, %v1425
      %v1478 = vadd.f32 %v1256, %v1427
      %v1479 = vadd.f32 %v1257, %v1430
      %v1480 = vadd.f32 %v1258, %v1432
      %v1481 = vadd.f32 %v1259, %v1435
      %v1482 = vadd.f32 %v1260, %v1437
      %v1483 = vadd.f32 %v1261, %v1440
      %v1484 = vadd.f32 %v1262, %v1442
      %v1485 = vadd.f32 %v1263, %v1445
      %v1486 = vadd.f32 %v1264, %v1447
      %v1487 = vadd.f32 %v1265, %v1450
      %v1488 = vadd.f32 %v1266, %v1452
      %v1489 = vadd.f32 %v1267, %v1455
      %v1490 = vadd.f32 %v1268, %v1457
      %v1491 = vld [vmem:[%s566 + $0x1] sm:$0xff]
      %v1492 = vld [vmem:[%s566 + $0x9] sm:$0xff]
      %v1493 = vld [vmem:[%s566 + $0x19] sm:$0xff]
      %v1494 = vld [vmem:[%s566 + $0x21] sm:$0xff]
      %v1495 = vld [vmem:[%s566 + $0x31] sm:$0xff]
      %v1496 = vld [vmem:[%s566 + $0x39] sm:$0xff]
      %v1497 = vld [vmem:[%s566 + $0x49] sm:$0xff]
      %v1498 = vld [vmem:[%s566 + $0x51] sm:$0xff]
      %v1499 = vld [vmem:[%s566 + $0x61] sm:$0xff]
      %v1500 = vld [vmem:[%s566 + $0x69] sm:$0xff]
      %v1501 = vld [vmem:[%s566 + $0x79] sm:$0xff]
      %v1502 = vld [vmem:[%s566 + $0x81] sm:$0xff]
      %v1503 = vld [vmem:[%s566 + $0x91] sm:$0xff]
      %v1504 = vld [vmem:[%s566 + $0x99] sm:$0xff]
      %v1505 = vld [vmem:[%s566 + $0xa9] sm:$0xff]
      %v1506 = vld [vmem:[%s566 + $0xb1] sm:$0xff]
      %v1507 = vld [vmem:[%s566 + $0xc1] sm:$0xff]
      %v1508 = vld [vmem:[%s566 + $0xc9] sm:$0xff]
      %v1509 = vld [vmem:[%s566 + $0xd9] sm:$0xff]
      %v1510 = vld [vmem:[%s566 + $0xe1] sm:$0xff]
      %v1511 = vld [vmem:[%s566 + $0xf1] sm:$0xff]
      %v1512 = vld [vmem:[%s566 + $0xf9] sm:$0xff]
      %v1513 = vld [vmem:[%s566 + $0x109] sm:$0xff]
      %v1514 = vld [vmem:[%s566 + $0x111] sm:$0xff]
      %v1515 = vld [vmem:[%s566 + $0x121] sm:$0xff]
      %v1516 = vld [vmem:[%s566 + $0x129] sm:$0xff]
      %v1517 = vld [vmem:[%s566 + $0x139] sm:$0xff]
      %v1518 = vld [vmem:[%s566 + $0x141] sm:$0xff]
      %v1519 = vld [vmem:[%s566 + $0x151] sm:$0xff]
      %v1520 = vld [vmem:[%s566 + $0x159] sm:$0xff]
      %v1521 = vld [vmem:[%s566 + $0x169] sm:$0xff]
      %v1522 = vld [vmem:[%s566 + $0x171] sm:$0xff]
      %v1523 = vpack.c.bf16 %v1492, %v1491
      %v1524 = vpack.c.bf16 %v1494, %v1493
      %v1525 = vpack.c.bf16 %v1496, %v1495
      %v1526 = vpack.c.bf16 %v1498, %v1497
      %v1527 = vpack.c.bf16 %v1500, %v1499
      %v1528 = vpack.c.bf16 %v1502, %v1501
      %v1529 = vpack.c.bf16 %v1504, %v1503
      %v1530 = vpack.c.bf16 %v1506, %v1505
      %v1531 = vpack.c.bf16 %v1508, %v1507
      %v1532 = vpack.c.bf16 %v1510, %v1509
      %v1533 = vpack.c.bf16 %v1512, %v1511
      %v1534 = vpack.c.bf16 %v1514, %v1513
      %v1535 = vpack.c.bf16 %v1516, %v1515
      %v1536 = vpack.c.bf16 %v1518, %v1517
      %v1537 = vpack.c.bf16 %v1520, %v1519
      %v1538 = vpack.c.bf16 %v1522, %v1521
      %s1539 = scalar_lea.vmem %s3, 8
      %v1540 = vld [vmem:[%s1539] sm:$0x3]
      %v1542 = vsel %vm510, %v1523, 0
      %v1545 = vsel %vm510, %v1524, 0
      %v1548 = vsel %vm510, %v1525, 0
      %v1551 = vsel %vm510, %v1526, 0
      %v1554 = vsel %vm510, %v1527, 0
      %v1557 = vsel %vm510, %v1528, 0
      %v1560 = vsel %vm510, %v1529, 0
      %v1563 = vsel %vm510, %v1530, 0
      %v1566 = vsel %vm510, %v1531, 0
      %v1569 = vsel %vm510, %v1532, 0
      %v1572 = vsel %vm510, %v1533, 0
      %v1575 = vsel %vm510, %v1534, 0
      %v1578 = vsel %vm510, %v1535, 0
      %v1581 = vsel %vm510, %v1536, 0
      %v1584 = vsel %vm510, %v1537, 0
      %v1587 = vsel %vm510, %v1538, 0
      %v1590 = vsel %vm700, %v1540, 0
      %1592 = vmatpush.bf16.msra.mxu0 0
      %1593 = vmatpush.bf16.msra.mxu0 0
      %1594 = vmatpush.bf16.msra.mxu0 0
      %1595 = vmatpush.bf16.msra.mxu0 0
      %1596 = vmatpush.bf16.msra.mxu0 0
      %1597 = vmatpush.bf16.msra.mxu0 0
      %1598 = vmatpush.bf16.msra.mxu0 0
      %1599 = vmatpush.bf16.msra.mxu0 %v1590
      %1600 = vmatmul.bf16.gmra.mxu0 %v1542
      %v1601 = vpop.f32.mrf.mxu0
      %v1602 = vadd.f32 0.0, %v1601
      %v1603 = vpop.f32.mrf.mxu0
      %v1604 = vadd.f32 0.0, %v1603
      %1605 = vmatmul.bf16.gmra.mxu0 %v1545
      %v1606 = vpop.f32.mrf.mxu0
      %v1607 = vadd.f32 0.0, %v1606
      %v1608 = vpop.f32.mrf.mxu0
      %v1609 = vadd.f32 0.0, %v1608
      %1610 = vmatmul.bf16.gmra.mxu0 %v1548
      %v1611 = vpop.f32.mrf.mxu0
      %v1612 = vadd.f32 0.0, %v1611
      %v1613 = vpop.f32.mrf.mxu0
      %v1614 = vadd.f32 0.0, %v1613
      %1615 = vmatmul.bf16.gmra.mxu0 %v1551
      %v1616 = vpop.f32.mrf.mxu0
      %v1617 = vadd.f32 0.0, %v1616
      %v1618 = vpop.f32.mrf.mxu0
      %v1619 = vadd.f32 0.0, %v1618
      %1620 = vmatmul.bf16.gmra.mxu0 %v1554
      %v1621 = vpop.f32.mrf.mxu0
      %v1622 = vadd.f32 0.0, %v1621
      %v1623 = vpop.f32.mrf.mxu0
      %v1624 = vadd.f32 0.0, %v1623
      %1625 = vmatmul.bf16.gmra.mxu0 %v1557
      %v1626 = vpop.f32.mrf.mxu0
      %v1627 = vadd.f32 0.0, %v1626
      %v1628 = vpop.f32.mrf.mxu0
      %v1629 = vadd.f32 0.0, %v1628
      %1630 = vmatmul.bf16.gmra.mxu0 %v1560
      %v1631 = vpop.f32.mrf.mxu0
      %v1632 = vadd.f32 0.0, %v1631
      %v1633 = vpop.f32.mrf.mxu0
      %v1634 = vadd.f32 0.0, %v1633
      %1635 = vmatmul.bf16.gmra.mxu0 %v1563
      %v1636 = vpop.f32.mrf.mxu0
      %v1637 = vadd.f32 0.0, %v1636
      %v1638 = vpop.f32.mrf.mxu0
      %v1639 = vadd.f32 0.0, %v1638
      %1640 = vmatmul.bf16.gmra.mxu0 %v1566
      %v1641 = vpop.f32.mrf.mxu0
      %v1642 = vadd.f32 0.0, %v1641
      %v1643 = vpop.f32.mrf.mxu0
      %v1644 = vadd.f32 0.0, %v1643
      %1645 = vmatmul.bf16.gmra.mxu0 %v1569
      %v1646 = vpop.f32.mrf.mxu0
      %v1647 = vadd.f32 0.0, %v1646
      %v1648 = vpop.f32.mrf.mxu0
      %v1649 = vadd.f32 0.0, %v1648
      %1650 = vmatmul.bf16.gmra.mxu0 %v1572
      %v1651 = vpop.f32.mrf.mxu0
      %v1652 = vadd.f32 0.0, %v1651
      %v1653 = vpop.f32.mrf.mxu0
      %v1654 = vadd.f32 0.0, %v1653
      %1655 = vmatmul.bf16.gmra.mxu0 %v1575
      %v1656 = vpop.f32.mrf.mxu0
      %v1657 = vadd.f32 0.0, %v1656
      %v1658 = vpop.f32.mrf.mxu0
      %v1659 = vadd.f32 0.0, %v1658
      %1660 = vmatmul.bf16.gmra.mxu0 %v1578
      %v1661 = vpop.f32.mrf.mxu0
      %v1662 = vadd.f32 0.0, %v1661
      %v1663 = vpop.f32.mrf.mxu0
      %v1664 = vadd.f32 0.0, %v1663
      %1665 = vmatmul.bf16.gmra.mxu0 %v1581
      %v1666 = vpop.f32.mrf.mxu0
      %v1667 = vadd.f32 0.0, %v1666
      %v1668 = vpop.f32.mrf.mxu0
      %v1669 = vadd.f32 0.0, %v1668
      %1670 = vmatmul.bf16.gmra.mxu0 %v1584
      %v1671 = vpop.f32.mrf.mxu0
      %v1672 = vadd.f32 0.0, %v1671
      %v1673 = vpop.f32.mrf.mxu0
      %v1674 = vadd.f32 0.0, %v1673
      %1675 = vmatmul.bf16.gmra.mxu0 %v1587
      %v1676 = vpop.f32.mrf.mxu0
      %v1677 = vadd.f32 0.0, %v1676
      %v1678 = vpop.f32.mrf.mxu0
      %v1679 = vadd.f32 0.0, %v1678
      %1680 = vdwg.mxu0
      %v1681 = vadd.f32 %v1459, %v1602
      %v1682 = vadd.f32 %v1460, %v1604
      %v1683 = vadd.f32 %v1461, %v1607
      %v1684 = vadd.f32 %v1462, %v1609
      %v1685 = vadd.f32 %v1463, %v1612
      %v1686 = vadd.f32 %v1464, %v1614
      %v1687 = vadd.f32 %v1465, %v1617
      %v1688 = vadd.f32 %v1466, %v1619
      %v1689 = vadd.f32 %v1467, %v1622
      %v1690 = vadd.f32 %v1468, %v1624
      %v1691 = vadd.f32 %v1469, %v1627
      %v1692 = vadd.f32 %v1470, %v1629
      %v1693 = vadd.f32 %v1471, %v1632
      %v1694 = vadd.f32 %v1472, %v1634
      %v1695 = vadd.f32 %v1473, %v1637
      %v1696 = vadd.f32 %v1474, %v1639
      %v1697 = vadd.f32 %v1475, %v1642
      %v1698 = vadd.f32 %v1476, %v1644
      %v1699 = vadd.f32 %v1477, %v1647
      %v1700 = vadd.f32 %v1478, %v1649
      %v1701 = vadd.f32 %v1479, %v1652
      %v1702 = vadd.f32 %v1480, %v1654
      %v1703 = vadd.f32 %v1481, %v1657
      %v1704 = vadd.f32 %v1482, %v1659
      %v1705 = vadd.f32 %v1483, %v1662
      %v1706 = vadd.f32 %v1484, %v1664
      %v1707 = vadd.f32 %v1485, %v1667
      %v1708 = vadd.f32 %v1486, %v1669
      %v1709 = vadd.f32 %v1487, %v1672
      %v1710 = vadd.f32 %v1488, %v1674
      %v1711 = vadd.f32 %v1489, %v1677
      %v1712 = vadd.f32 %v1490, %v1679
      %v1713 = vld [vmem:[%s566 + $0x2] sm:$0xff]
      %v1714 = vld [vmem:[%s566 + $0xa] sm:$0xff]
      %v1715 = vld [vmem:[%s566 + $0x1a] sm:$0xff]
      %v1716 = vld [vmem:[%s566 + $0x22] sm:$0xff]
      %v1717 = vld [vmem:[%s566 + $0x32] sm:$0xff]
      %v1718 = vld [vmem:[%s566 + $0x3a] sm:$0xff]
      %v1719 = vld [vmem:[%s566 + $0x4a] sm:$0xff]
      %v1720 = vld [vmem:[%s566 + $0x52] sm:$0xff]
      %v1721 = vld [vmem:[%s566 + $0x62] sm:$0xff]
      %v1722 = vld [vmem:[%s566 + $0x6a] sm:$0xff]
      %v1723 = vld [vmem:[%s566 + $0x7a] sm:$0xff]
      %v1724 = vld [vmem:[%s566 + $0x82] sm:$0xff]
      %v1725 = vld [vmem:[%s566 + $0x92] sm:$0xff]
      %v1726 = vld [vmem:[%s566 + $0x9a] sm:$0xff]
      %v1727 = vld [vmem:[%s566 + $0xaa] sm:$0xff]
      %v1728 = vld [vmem:[%s566 + $0xb2] sm:$0xff]
      %v1729 = vld [vmem:[%s566 + $0xc2] sm:$0xff]
      %v1730 = vld [vmem:[%s566 + $0xca] sm:$0xff]
      %v1731 = vld [vmem:[%s566 + $0xda] sm:$0xff]
      %v1732 = vld [vmem:[%s566 + $0xe2] sm:$0xff]
      %v1733 = vld [vmem:[%s566 + $0xf2] sm:$0xff]
      %v1734 = vld [vmem:[%s566 + $0xfa] sm:$0xff]
      %v1735 = vld [vmem:[%s566 + $0x10a] sm:$0xff]
      %v1736 = vld [vmem:[%s566 + $0x112] sm:$0xff]
      %v1737 = vld [vmem:[%s566 + $0x122] sm:$0xff]
      %v1738 = vld [vmem:[%s566 + $0x12a] sm:$0xff]
      %v1739 = vld [vmem:[%s566 + $0x13a] sm:$0xff]
      %v1740 = vld [vmem:[%s566 + $0x142] sm:$0xff]
      %v1741 = vld [vmem:[%s566 + $0x152] sm:$0xff]
      %v1742 = vld [vmem:[%s566 + $0x15a] sm:$0xff]
      %v1743 = vld [vmem:[%s566 + $0x16a] sm:$0xff]
      %v1744 = vld [vmem:[%s566 + $0x172] sm:$0xff]
      %v1745 = vpack.c.bf16 %v1714, %v1713
      %v1746 = vpack.c.bf16 %v1716, %v1715
      %v1747 = vpack.c.bf16 %v1718, %v1717
      %v1748 = vpack.c.bf16 %v1720, %v1719
      %v1749 = vpack.c.bf16 %v1722, %v1721
      %v1750 = vpack.c.bf16 %v1724, %v1723
      %v1751 = vpack.c.bf16 %v1726, %v1725
      %v1752 = vpack.c.bf16 %v1728, %v1727
      %v1753 = vpack.c.bf16 %v1730, %v1729
      %v1754 = vpack.c.bf16 %v1732, %v1731
      %v1755 = vpack.c.bf16 %v1734, %v1733
      %v1756 = vpack.c.bf16 %v1736, %v1735
      %v1757 = vpack.c.bf16 %v1738, %v1737
      %v1758 = vpack.c.bf16 %v1740, %v1739
      %v1759 = vpack.c.bf16 %v1742, %v1741
      %v1760 = vpack.c.bf16 %v1744, %v1743
      %s1761 = scalar_lea.vmem %s3, 10
      %v1762 = vld [vmem:[%s1761] sm:$0x3]
      %v1764 = vsel %vm510, %v1745, 0
      %v1767 = vsel %vm510, %v1746, 0
      %v1770 = vsel %vm510, %v1747, 0
      %v1773 = vsel %vm510, %v1748, 0
      %v1776 = vsel %vm510, %v1749, 0
      %v1779 = vsel %vm510, %v1750, 0
      %v1782 = vsel %vm510, %v1751, 0
      %v1785 = vsel %vm510, %v1752, 0
      %v1788 = vsel %vm510, %v1753, 0
      %v1791 = vsel %vm510, %v1754, 0
      %v1794 = vsel %vm510, %v1755, 0
      %v1797 = vsel %vm510, %v1756, 0
      %v1800 = vsel %vm510, %v1757, 0
      %v1803 = vsel %vm510, %v1758, 0
      %v1806 = vsel %vm510, %v1759, 0
      %v1809 = vsel %vm510, %v1760, 0
      %v1812 = vsel %vm700, %v1762, 0
      %1814 = vmatpush.bf16.msra.mxu0 0
      %1815 = vmatpush.bf16.msra.mxu0 0
      %1816 = vmatpush.bf16.msra.mxu0 0
      %1817 = vmatpush.bf16.msra.mxu0 0
      %1818 = vmatpush.bf16.msra.mxu0 0
      %1819 = vmatpush.bf16.msra.mxu0 0
      %1820 = vmatpush.bf16.msra.mxu0 0
      %1821 = vmatpush.bf16.msra.mxu0 %v1812
      %1822 = vmatmul.bf16.gmra.mxu0 %v1764
      %v1823 = vpop.f32.mrf.mxu0
      %v1824 = vadd.f32 0.0, %v1823
      %v1825 = vpop.f32.mrf.mxu0
      %v1826 = vadd.f32 0.0, %v1825
      %1827 = vmatmul.bf16.gmra.mxu0 %v1767
      %v1828 = vpop.f32.mrf.mxu0
      %v1829 = vadd.f32 0.0, %v1828
      %v1830 = vpop.f32.mrf.mxu0
      %v1831 = vadd.f32 0.0, %v1830
      %1832 = vmatmul.bf16.gmra.mxu0 %v1770
      %v1833 = vpop.f32.mrf.mxu0
      %v1834 = vadd.f32 0.0, %v1833
      %v1835 = vpop.f32.mrf.mxu0
      %v1836 = vadd.f32 0.0, %v1835
      %1837 = vmatmul.bf16.gmra.mxu0 %v1773
      %v1838 = vpop.f32.mrf.mxu0
      %v1839 = vadd.f32 0.0, %v1838
      %v1840 = vpop.f32.mrf.mxu0
      %v1841 = vadd.f32 0.0, %v1840
      %1842 = vmatmul.bf16.gmra.mxu0 %v1776
      %v1843 = vpop.f32.mrf.mxu0
      %v1844 = vadd.f32 0.0, %v1843
      %v1845 = vpop.f32.mrf.mxu0
      %v1846 = vadd.f32 0.0, %v1845
      %1847 = vmatmul.bf16.gmra.mxu0 %v1779
      %v1848 = vpop.f32.mrf.mxu0
      %v1849 = vadd.f32 0.0, %v1848
      %v1850 = vpop.f32.mrf.mxu0
      %v1851 = vadd.f32 0.0, %v1850
      %1852 = vmatmul.bf16.gmra.mxu0 %v1782
      %v1853 = vpop.f32.mrf.mxu0
      %v1854 = vadd.f32 0.0, %v1853
      %v1855 = vpop.f32.mrf.mxu0
      %v1856 = vadd.f32 0.0, %v1855
      %1857 = vmatmul.bf16.gmra.mxu0 %v1785
      %v1858 = vpop.f32.mrf.mxu0
      %v1859 = vadd.f32 0.0, %v1858
      %v1860 = vpop.f32.mrf.mxu0
      %v1861 = vadd.f32 0.0, %v1860
      %1862 = vmatmul.bf16.gmra.mxu0 %v1788
      %v1863 = vpop.f32.mrf.mxu0
      %v1864 = vadd.f32 0.0, %v1863
      %v1865 = vpop.f32.mrf.mxu0
      %v1866 = vadd.f32 0.0, %v1865
      %1867 = vmatmul.bf16.gmra.mxu0 %v1791
      %v1868 = vpop.f32.mrf.mxu0
      %v1869 = vadd.f32 0.0, %v1868
      %v1870 = vpop.f32.mrf.mxu0
      %v1871 = vadd.f32 0.0, %v1870
      %1872 = vmatmul.bf16.gmra.mxu0 %v1794
      %v1873 = vpop.f32.mrf.mxu0
      %v1874 = vadd.f32 0.0, %v1873
      %v1875 = vpop.f32.mrf.mxu0
      %v1876 = vadd.f32 0.0, %v1875
      %1877 = vmatmul.bf16.gmra.mxu0 %v1797
      %v1878 = vpop.f32.mrf.mxu0
      %v1879 = vadd.f32 0.0, %v1878
      %v1880 = vpop.f32.mrf.mxu0
      %v1881 = vadd.f32 0.0, %v1880
      %1882 = vmatmul.bf16.gmra.mxu0 %v1800
      %v1883 = vpop.f32.mrf.mxu0
      %v1884 = vadd.f32 0.0, %v1883
      %v1885 = vpop.f32.mrf.mxu0
      %v1886 = vadd.f32 0.0, %v1885
      %1887 = vmatmul.bf16.gmra.mxu0 %v1803
      %v1888 = vpop.f32.mrf.mxu0
      %v1889 = vadd.f32 0.0, %v1888
      %v1890 = vpop.f32.mrf.mxu0
      %v1891 = vadd.f32 0.0, %v1890
      %1892 = vmatmul.bf16.gmra.mxu0 %v1806
      %v1893 = vpop.f32.mrf.mxu0
      %v1894 = vadd.f32 0.0, %v1893
      %v1895 = vpop.f32.mrf.mxu0
      %v1896 = vadd.f32 0.0, %v1895
      %1897 = vmatmul.bf16.gmra.mxu0 %v1809
      %v1898 = vpop.f32.mrf.mxu0
      %v1899 = vadd.f32 0.0, %v1898
      %v1900 = vpop.f32.mrf.mxu0
      %v1901 = vadd.f32 0.0, %v1900
      %1902 = vdwg.mxu0
      %v1903 = vadd.f32 %v1681, %v1824
      %v1904 = vadd.f32 %v1682, %v1826
      %v1905 = vadd.f32 %v1683, %v1829
      %v1906 = vadd.f32 %v1684, %v1831
      %v1907 = vadd.f32 %v1685, %v1834
      %v1908 = vadd.f32 %v1686, %v1836
      %v1909 = vadd.f32 %v1687, %v1839
      %v1910 = vadd.f32 %v1688, %v1841
      %v1911 = vadd.f32 %v1689, %v1844
      %v1912 = vadd.f32 %v1690, %v1846
      %v1913 = vadd.f32 %v1691, %v1849
      %v1914 = vadd.f32 %v1692, %v1851
      %v1915 = vadd.f32 %v1693, %v1854
      %v1916 = vadd.f32 %v1694, %v1856
      %v1917 = vadd.f32 %v1695, %v1859
      %v1918 = vadd.f32 %v1696, %v1861
      %v1919 = vadd.f32 %v1697, %v1864
      %v1920 = vadd.f32 %v1698, %v1866
      %v1921 = vadd.f32 %v1699, %v1869
      %v1922 = vadd.f32 %v1700, %v1871
      %v1923 = vadd.f32 %v1701, %v1874
      %v1924 = vadd.f32 %v1702, %v1876
      %v1925 = vadd.f32 %v1703, %v1879
      %v1926 = vadd.f32 %v1704, %v1881
      %v1927 = vadd.f32 %v1705, %v1884
      %v1928 = vadd.f32 %v1706, %v1886
      %v1929 = vadd.f32 %v1707, %v1889
      %v1930 = vadd.f32 %v1708, %v1891
      %v1931 = vadd.f32 %v1709, %v1894
      %v1932 = vadd.f32 %v1710, %v1896
      %v1933 = vadd.f32 %v1711, %v1899
      %v1934 = vadd.f32 %v1712, %v1901
      %s1935 = scalar_lea.vmem [#allocation2], 48
      %v1936 = vld [vmem:[%s1935] sm:$0xff]
      %v1937 = vld [vmem:[%s1935 + $0x8] sm:$0xff]
      %v1938 = vld [vmem:[%s1935 + $0x18] sm:$0xff]
      %v1939 = vld [vmem:[%s1935 + $0x20] sm:$0xff]
      %v1940 = vld [vmem:[%s1935 + $0x30] sm:$0xff]
      %v1941 = vld [vmem:[%s1935 + $0x38] sm:$0xff]
      %v1942 = vld [vmem:[%s1935 + $0x48] sm:$0xff]
      %v1943 = vld [vmem:[%s1935 + $0x50] sm:$0xff]
      %v1944 = vld [vmem:[%s1935 + $0x60] sm:$0xff]
      %v1945 = vld [vmem:[%s1935 + $0x68] sm:$0xff]
      %v1946 = vld [vmem:[%s1935 + $0x78] sm:$0xff]
      %v1947 = vld [vmem:[%s1935 + $0x80] sm:$0xff]
      %v1948 = vld [vmem:[%s1935 + $0x90] sm:$0xff]
      %v1949 = vld [vmem:[%s1935 + $0x98] sm:$0xff]
      %v1950 = vld [vmem:[%s1935 + $0xa8] sm:$0xff]
      %v1951 = vld [vmem:[%s1935 + $0xb0] sm:$0xff]
      %v1952 = vld [vmem:[%s1935 + $0xc0] sm:$0xff]
      %v1953 = vld [vmem:[%s1935 + $0xc8] sm:$0xff]
      %v1954 = vld [vmem:[%s1935 + $0xd8] sm:$0xff]
      %v1955 = vld [vmem:[%s1935 + $0xe0] sm:$0xff]
      %v1956 = vld [vmem:[%s1935 + $0xf0] sm:$0xff]
      %v1957 = vld [vmem:[%s1935 + $0xf8] sm:$0xff]
      %v1958 = vld [vmem:[%s1935 + $0x108] sm:$0xff]
      %v1959 = vld [vmem:[%s1935 + $0x110] sm:$0xff]
      %v1960 = vld [vmem:[%s1935 + $0x120] sm:$0xff]
      %v1961 = vld [vmem:[%s1935 + $0x128] sm:$0xff]
      %v1962 = vld [vmem:[%s1935 + $0x138] sm:$0xff]
      %v1963 = vld [vmem:[%s1935 + $0x140] sm:$0xff]
      %v1964 = vld [vmem:[%s1935 + $0x150] sm:$0xff]
      %v1965 = vld [vmem:[%s1935 + $0x158] sm:$0xff]
      %v1966 = vld [vmem:[%s1935 + $0x168] sm:$0xff]
      %v1967 = vld [vmem:[%s1935 + $0x170] sm:$0xff]
      %v1968 = vpack.c.bf16 %v1937, %v1936
      %v1969 = vpack.c.bf16 %v1939, %v1938
      %v1970 = vpack.c.bf16 %v1941, %v1940
      %v1971 = vpack.c.bf16 %v1943, %v1942
      %v1972 = vpack.c.bf16 %v1945, %v1944
      %v1973 = vpack.c.bf16 %v1947, %v1946
      %v1974 = vpack.c.bf16 %v1949, %v1948
      %v1975 = vpack.c.bf16 %v1951, %v1950
      %v1976 = vpack.c.bf16 %v1953, %v1952
      %v1977 = vpack.c.bf16 %v1955, %v1954
      %v1978 = vpack.c.bf16 %v1957, %v1956
      %v1979 = vpack.c.bf16 %v1959, %v1958
      %v1980 = vpack.c.bf16 %v1961, %v1960
      %v1981 = vpack.c.bf16 %v1963, %v1962
      %v1982 = vpack.c.bf16 %v1965, %v1964
      %v1983 = vpack.c.bf16 %v1967, %v1966
      %s1984 = scalar_lea.vmem %s3, 12
      %v1985 = vld [vmem:[%s1984] sm:$0x3]
      %v1987 = vsel %vm510, %v1968, 0
      %v1990 = vsel %vm510, %v1969, 0
      %v1993 = vsel %vm510, %v1970, 0
      %v1996 = vsel %vm510, %v1971, 0
      %v1999 = vsel %vm510, %v1972, 0
      %v2002 = vsel %vm510, %v1973, 0
      %v2005 = vsel %vm510, %v1974, 0
      %v2008 = vsel %vm510, %v1975, 0
      %v2011 = vsel %vm510, %v1976, 0
      %v2014 = vsel %vm510, %v1977, 0
      %v2017 = vsel %vm510, %v1978, 0
      %v2020 = vsel %vm510, %v1979, 0
      %v2023 = vsel %vm510, %v1980, 0
      %v2026 = vsel %vm510, %v1981, 0
      %v2029 = vsel %vm510, %v1982, 0
      %v2032 = vsel %vm510, %v1983, 0
      %v2035 = vsel %vm700, %v1985, 0
      %2037 = vmatpush.bf16.msra.mxu0 0
      %2038 = vmatpush.bf16.msra.mxu0 0
      %2039 = vmatpush.bf16.msra.mxu0 0
      %2040 = vmatpush.bf16.msra.mxu0 0
      %2041 = vmatpush.bf16.msra.mxu0 0
      %2042 = vmatpush.bf16.msra.mxu0 0
      %2043 = vmatpush.bf16.msra.mxu0 0
      %2044 = vmatpush.bf16.msra.mxu0 %v2035
      %2045 = vmatmul.bf16.gmra.mxu0 %v1987
      %v2046 = vpop.f32.mrf.mxu0
      %v2047 = vadd.f32 0.0, %v2046
      %v2048 = vpop.f32.mrf.mxu0
      %v2049 = vadd.f32 0.0, %v2048
      %2050 = vmatmul.bf16.gmra.mxu0 %v1990
      %v2051 = vpop.f32.mrf.mxu0
      %v2052 = vadd.f32 0.0, %v2051
      %v2053 = vpop.f32.mrf.mxu0
      %v2054 = vadd.f32 0.0, %v2053
      %2055 = vmatmul.bf16.gmra.mxu0 %v1993
      %v2056 = vpop.f32.mrf.mxu0
      %v2057 = vadd.f32 0.0, %v2056
      %v2058 = vpop.f32.mrf.mxu0
      %v2059 = vadd.f32 0.0, %v2058
      %2060 = vmatmul.bf16.gmra.mxu0 %v1996
      %v2061 = vpop.f32.mrf.mxu0
      %v2062 = vadd.f32 0.0, %v2061
      %v2063 = vpop.f32.mrf.mxu0
      %v2064 = vadd.f32 0.0, %v2063
      %2065 = vmatmul.bf16.gmra.mxu0 %v1999
      %v2066 = vpop.f32.mrf.mxu0
      %v2067 = vadd.f32 0.0, %v2066
      %v2068 = vpop.f32.mrf.mxu0
      %v2069 = vadd.f32 0.0, %v2068
      %2070 = vmatmul.bf16.gmra.mxu0 %v2002
      %v2071 = vpop.f32.mrf.mxu0
      %v2072 = vadd.f32 0.0, %v2071
      %v2073 = vpop.f32.mrf.mxu0
      %v2074 = vadd.f32 0.0, %v2073
      %2075 = vmatmul.bf16.gmra.mxu0 %v2005
      %v2076 = vpop.f32.mrf.mxu0
      %v2077 = vadd.f32 0.0, %v2076
      %v2078 = vpop.f32.mrf.mxu0
      %v2079 = vadd.f32 0.0, %v2078
      %2080 = vmatmul.bf16.gmra.mxu0 %v2008
      %v2081 = vpop.f32.mrf.mxu0
      %v2082 = vadd.f32 0.0, %v2081
      %v2083 = vpop.f32.mrf.mxu0
      %v2084 = vadd.f32 0.0, %v2083
      %2085 = vmatmul.bf16.gmra.mxu0 %v2011
      %v2086 = vpop.f32.mrf.mxu0
      %v2087 = vadd.f32 0.0, %v2086
      %v2088 = vpop.f32.mrf.mxu0
      %v2089 = vadd.f32 0.0, %v2088
      %2090 = vmatmul.bf16.gmra.mxu0 %v2014
      %v2091 = vpop.f32.mrf.mxu0
      %v2092 = vadd.f32 0.0, %v2091
      %v2093 = vpop.f32.mrf.mxu0
      %v2094 = vadd.f32 0.0, %v2093
      %2095 = vmatmul.bf16.gmra.mxu0 %v2017
      %v2096 = vpop.f32.mrf.mxu0
      %v2097 = vadd.f32 0.0, %v2096
      %v2098 = vpop.f32.mrf.mxu0
      %v2099 = vadd.f32 0.0, %v2098
      %2100 = vmatmul.bf16.gmra.mxu0 %v2020
      %v2101 = vpop.f32.mrf.mxu0
      %v2102 = vadd.f32 0.0, %v2101
      %v2103 = vpop.f32.mrf.mxu0
      %v2104 = vadd.f32 0.0, %v2103
      %2105 = vmatmul.bf16.gmra.mxu0 %v2023
      %v2106 = vpop.f32.mrf.mxu0
      %v2107 = vadd.f32 0.0, %v2106
      %v2108 = vpop.f32.mrf.mxu0
      %v2109 = vadd.f32 0.0, %v2108
      %2110 = vmatmul.bf16.gmra.mxu0 %v2026
      %v2111 = vpop.f32.mrf.mxu0
      %v2112 = vadd.f32 0.0, %v2111
      %v2113 = vpop.f32.mrf.mxu0
      %v2114 = vadd.f32 0.0, %v2113
      %2115 = vmatmul.bf16.gmra.mxu0 %v2029
      %v2116 = vpop.f32.mrf.mxu0
      %v2117 = vadd.f32 0.0, %v2116
      %v2118 = vpop.f32.mrf.mxu0
      %v2119 = vadd.f32 0.0, %v2118
      %2120 = vmatmul.bf16.gmra.mxu0 %v2032
      %v2121 = vpop.f32.mrf.mxu0
      %v2122 = vadd.f32 0.0, %v2121
      %v2123 = vpop.f32.mrf.mxu0
      %v2124 = vadd.f32 0.0, %v2123
      %2125 = vdwg.mxu0
      %v2126 = vadd.f32 %v1903, %v2047
      %v2127 = vadd.f32 %v1904, %v2049
      %v2128 = vadd.f32 %v1905, %v2052
      %v2129 = vadd.f32 %v1906, %v2054
      %v2130 = vadd.f32 %v1907, %v2057
      %v2131 = vadd.f32 %v1908, %v2059
      %v2132 = vadd.f32 %v1909, %v2062
      %v2133 = vadd.f32 %v1910, %v2064
      %v2134 = vadd.f32 %v1911, %v2067
      %v2135 = vadd.f32 %v1912, %v2069
      %v2136 = vadd.f32 %v1913, %v2072
      %v2137 = vadd.f32 %v1914, %v2074
      %v2138 = vadd.f32 %v1915, %v2077
      %v2139 = vadd.f32 %v1916, %v2079
      %v2140 = vadd.f32 %v1917, %v2082
      %v2141 = vadd.f32 %v1918, %v2084
      %v2142 = vadd.f32 %v1919, %v2087
      %v2143 = vadd.f32 %v1920, %v2089
      %v2144 = vadd.f32 %v1921, %v2092
      %v2145 = vadd.f32 %v1922, %v2094
      %v2146 = vadd.f32 %v1923, %v2097
      %v2147 = vadd.f32 %v1924, %v2099
      %v2148 = vadd.f32 %v1925, %v2102
      %v2149 = vadd.f32 %v1926, %v2104
      %v2150 = vadd.f32 %v1927, %v2107
      %v2151 = vadd.f32 %v1928, %v2109
      %v2152 = vadd.f32 %v1929, %v2112
      %v2153 = vadd.f32 %v1930, %v2114
      %v2154 = vadd.f32 %v1931, %v2117
      %v2155 = vadd.f32 %v1932, %v2119
      %v2156 = vadd.f32 %v1933, %v2122
      %v2157 = vadd.f32 %v1934, %v2124
      %v2158 = vld [vmem:[%s1935 + $0x1] sm:$0xff]
      %v2159 = vld [vmem:[%s1935 + $0x9] sm:$0xff]
      %v2160 = vld [vmem:[%s1935 + $0x19] sm:$0xff]
      %v2161 = vld [vmem:[%s1935 + $0x21] sm:$0xff]
      %v2162 = vld [vmem:[%s1935 + $0x31] sm:$0xff]
      %v2163 = vld [vmem:[%s1935 + $0x39] sm:$0xff]
      %v2164 = vld [vmem:[%s1935 + $0x49] sm:$0xff]
      %v2165 = vld [vmem:[%s1935 + $0x51] sm:$0xff]
      %v2166 = vld [vmem:[%s1935 + $0x61] sm:$0xff]
      %v2167 = vld [vmem:[%s1935 + $0x69] sm:$0xff]
      %v2168 = vld [vmem:[%s1935 + $0x79] sm:$0xff]
      %v2169 = vld [vmem:[%s1935 + $0x81] sm:$0xff]
      %v2170 = vld [vmem:[%s1935 + $0x91] sm:$0xff]
      %v2171 = vld [vmem:[%s1935 + $0x99] sm:$0xff]
      %v2172 = vld [vmem:[%s1935 + $0xa9] sm:$0xff]
      %v2173 = vld [vmem:[%s1935 + $0xb1] sm:$0xff]
      %v2174 = vld [vmem:[%s1935 + $0xc1] sm:$0xff]
      %v2175 = vld [vmem:[%s1935 + $0xc9] sm:$0xff]
      %v2176 = vld [vmem:[%s1935 + $0xd9] sm:$0xff]
      %v2177 = vld [vmem:[%s1935 + $0xe1] sm:$0xff]
      %v2178 = vld [vmem:[%s1935 + $0xf1] sm:$0xff]
      %v2179 = vld [vmem:[%s1935 + $0xf9] sm:$0xff]
      %v2180 = vld [vmem:[%s1935 + $0x109] sm:$0xff]
      %v2181 = vld [vmem:[%s1935 + $0x111] sm:$0xff]
      %v2182 = vld [vmem:[%s1935 + $0x121] sm:$0xff]
      %v2183 = vld [vmem:[%s1935 + $0x129] sm:$0xff]
      %v2184 = vld [vmem:[%s1935 + $0x139] sm:$0xff]
      %v2185 = vld [vmem:[%s1935 + $0x141] sm:$0xff]
      %v2186 = vld [vmem:[%s1935 + $0x151] sm:$0xff]
      %v2187 = vld [vmem:[%s1935 + $0x159] sm:$0xff]
      %v2188 = vld [vmem:[%s1935 + $0x169] sm:$0xff]
      %v2189 = vld [vmem:[%s1935 + $0x171] sm:$0xff]
      %v2190 = vpack.c.bf16 %v2159, %v2158
      %v2191 = vpack.c.bf16 %v2161, %v2160
      %v2192 = vpack.c.bf16 %v2163, %v2162
      %v2193 = vpack.c.bf16 %v2165, %v2164
      %v2194 = vpack.c.bf16 %v2167, %v2166
      %v2195 = vpack.c.bf16 %v2169, %v2168
      %v2196 = vpack.c.bf16 %v2171, %v2170
      %v2197 = vpack.c.bf16 %v2173, %v2172
      %v2198 = vpack.c.bf16 %v2175, %v2174
      %v2199 = vpack.c.bf16 %v2177, %v2176
      %v2200 = vpack.c.bf16 %v2179, %v2178
      %v2201 = vpack.c.bf16 %v2181, %v2180
      %v2202 = vpack.c.bf16 %v2183, %v2182
      %v2203 = vpack.c.bf16 %v2185, %v2184
      %v2204 = vpack.c.bf16 %v2187, %v2186
      %v2205 = vpack.c.bf16 %v2189, %v2188
      %s2206 = scalar_lea.vmem %s3, 14
      %v2207 = vld [vmem:[%s2206] sm:$0x3]
      %v2209 = vsel %vm510, %v2190, 0
      %v2212 = vsel %vm510, %v2191, 0
      %v2215 = vsel %vm510, %v2192, 0
      %v2218 = vsel %vm510, %v2193, 0
      %v2221 = vsel %vm510, %v2194, 0
      %v2224 = vsel %vm510, %v2195, 0
      %v2227 = vsel %vm510, %v2196, 0
      %v2230 = vsel %vm510, %v2197, 0
      %v2233 = vsel %vm510, %v2198, 0
      %v2236 = vsel %vm510, %v2199, 0
      %v2239 = vsel %vm510, %v2200, 0
      %v2242 = vsel %vm510, %v2201, 0
      %v2245 = vsel %vm510, %v2202, 0
      %v2248 = vsel %vm510, %v2203, 0
      %v2251 = vsel %vm510, %v2204, 0
      %v2254 = vsel %vm510, %v2205, 0
      %v2257 = vsel %vm700, %v2207, 0
      %2259 = vmatpush.bf16.msra.mxu0 0
      %2260 = vmatpush.bf16.msra.mxu0 0
      %2261 = vmatpush.bf16.msra.mxu0 0
      %2262 = vmatpush.bf16.msra.mxu0 0
      %2263 = vmatpush.bf16.msra.mxu0 0
      %2264 = vmatpush.bf16.msra.mxu0 0
      %2265 = vmatpush.bf16.msra.mxu0 0
      %2266 = vmatpush.bf16.msra.mxu0 %v2257
      %2267 = vmatmul.bf16.gmra.mxu0 %v2209
      %v2268 = vpop.f32.mrf.mxu0
      %v2269 = vadd.f32 0.0, %v2268
      %v2270 = vpop.f32.mrf.mxu0
      %v2271 = vadd.f32 0.0, %v2270
      %2272 = vmatmul.bf16.gmra.mxu0 %v2212
      %v2273 = vpop.f32.mrf.mxu0
      %v2274 = vadd.f32 0.0, %v2273
      %v2275 = vpop.f32.mrf.mxu0
      %v2276 = vadd.f32 0.0, %v2275
      %2277 = vmatmul.bf16.gmra.mxu0 %v2215
      %v2278 = vpop.f32.mrf.mxu0
      %v2279 = vadd.f32 0.0, %v2278
      %v2280 = vpop.f32.mrf.mxu0
      %v2281 = vadd.f32 0.0, %v2280
      %2282 = vmatmul.bf16.gmra.mxu0 %v2218
      %v2283 = vpop.f32.mrf.mxu0
      %v2284 = vadd.f32 0.0, %v2283
      %v2285 = vpop.f32.mrf.mxu0
      %v2286 = vadd.f32 0.0, %v2285
      %2287 = vmatmul.bf16.gmra.mxu0 %v2221
      %v2288 = vpop.f32.mrf.mxu0
      %v2289 = vadd.f32 0.0, %v2288
      %v2290 = vpop.f32.mrf.mxu0
      %v2291 = vadd.f32 0.0, %v2290
      %2292 = vmatmul.bf16.gmra.mxu0 %v2224
      %v2293 = vpop.f32.mrf.mxu0
      %v2294 = vadd.f32 0.0, %v2293
      %v2295 = vpop.f32.mrf.mxu0
      %v2296 = vadd.f32 0.0, %v2295
      %2297 = vmatmul.bf16.gmra.mxu0 %v2227
      %v2298 = vpop.f32.mrf.mxu0
      %v2299 = vadd.f32 0.0, %v2298
      %v2300 = vpop.f32.mrf.mxu0
      %v2301 = vadd.f32 0.0, %v2300
      %2302 = vmatmul.bf16.gmra.mxu0 %v2230
      %v2303 = vpop.f32.mrf.mxu0
      %v2304 = vadd.f32 0.0, %v2303
      %v2305 = vpop.f32.mrf.mxu0
      %v2306 = vadd.f32 0.0, %v2305
      %2307 = vmatmul.bf16.gmra.mxu0 %v2233
      %v2308 = vpop.f32.mrf.mxu0
      %v2309 = vadd.f32 0.0, %v2308
      %v2310 = vpop.f32.mrf.mxu0
      %v2311 = vadd.f32 0.0, %v2310
      %2312 = vmatmul.bf16.gmra.mxu0 %v2236
      %v2313 = vpop.f32.mrf.mxu0
      %v2314 = vadd.f32 0.0, %v2313
      %v2315 = vpop.f32.mrf.mxu0
      %v2316 = vadd.f32 0.0, %v2315
      %2317 = vmatmul.bf16.gmra.mxu0 %v2239
      %v2318 = vpop.f32.mrf.mxu0
      %v2319 = vadd.f32 0.0, %v2318
      %v2320 = vpop.f32.mrf.mxu0
      %v2321 = vadd.f32 0.0, %v2320
      %2322 = vmatmul.bf16.gmra.mxu0 %v2242
      %v2323 = vpop.f32.mrf.mxu0
      %v2324 = vadd.f32 0.0, %v2323
      %v2325 = vpop.f32.mrf.mxu0
      %v2326 = vadd.f32 0.0, %v2325
      %2327 = vmatmul.bf16.gmra.mxu0 %v2245
      %v2328 = vpop.f32.mrf.mxu0
      %v2329 = vadd.f32 0.0, %v2328
      %v2330 = vpop.f32.mrf.mxu0
      %v2331 = vadd.f32 0.0, %v2330
      %2332 = vmatmul.bf16.gmra.mxu0 %v2248
      %v2333 = vpop.f32.mrf.mxu0
      %v2334 = vadd.f32 0.0, %v2333
      %v2335 = vpop.f32.mrf.mxu0
      %v2336 = vadd.f32 0.0, %v2335
      %2337 = vmatmul.bf16.gmra.mxu0 %v2251
      %v2338 = vpop.f32.mrf.mxu0
      %v2339 = vadd.f32 0.0, %v2338
      %v2340 = vpop.f32.mrf.mxu0
      %v2341 = vadd.f32 0.0, %v2340
      %2342 = vmatmul.bf16.gmra.mxu0 %v2254
      %v2343 = vpop.f32.mrf.mxu0
      %v2344 = vadd.f32 0.0, %v2343
      %v2345 = vpop.f32.mrf.mxu0
      %v2346 = vadd.f32 0.0, %v2345
      %2347 = vdwg.mxu0
      %v2348 = vadd.f32 %v2126, %v2269
      %v2349 = vadd.f32 %v2127, %v2271
      %v2350 = vadd.f32 %v2128, %v2274
      %v2351 = vadd.f32 %v2129, %v2276
      %v2352 = vadd.f32 %v2130, %v2279
      %v2353 = vadd.f32 %v2131, %v2281
      %v2354 = vadd.f32 %v2132, %v2284
      %v2355 = vadd.f32 %v2133, %v2286
      %v2356 = vadd.f32 %v2134, %v2289
      %v2357 = vadd.f32 %v2135, %v2291
      %v2358 = vadd.f32 %v2136, %v2294
      %v2359 = vadd.f32 %v2137, %v2296
      %v2360 = vadd.f32 %v2138, %v2299
      %v2361 = vadd.f32 %v2139, %v2301
      %v2362 = vadd.f32 %v2140, %v2304
      %v2363 = vadd.f32 %v2141, %v2306
      %v2364 = vadd.f32 %v2142, %v2309
      %v2365 = vadd.f32 %v2143, %v2311
      %v2366 = vadd.f32 %v2144, %v2314
      %v2367 = vadd.f32 %v2145, %v2316
      %v2368 = vadd.f32 %v2146, %v2319
      %v2369 = vadd.f32 %v2147, %v2321
      %v2370 = vadd.f32 %v2148, %v2324
      %v2371 = vadd.f32 %v2149, %v2326
      %v2372 = vadd.f32 %v2150, %v2329
      %v2373 = vadd.f32 %v2151, %v2331
      %v2374 = vadd.f32 %v2152, %v2334
      %v2375 = vadd.f32 %v2153, %v2336
      %v2376 = vadd.f32 %v2154, %v2339
      %v2377 = vadd.f32 %v2155, %v2341
      %v2378 = vadd.f32 %v2156, %v2344
      %v2379 = vadd.f32 %v2157, %v2346
      %v2380 = vld [vmem:[%s1935 + $0x2] sm:$0xff]
      %v2381 = vld [vmem:[%s1935 + $0xa] sm:$0xff]
      %v2382 = vld [vmem:[%s1935 + $0x1a] sm:$0xff]
      %v2383 = vld [vmem:[%s1935 + $0x22] sm:$0xff]
      %v2384 = vld [vmem:[%s1935 + $0x32] sm:$0xff]
      %v2385 = vld [vmem:[%s1935 + $0x3a] sm:$0xff]
      %v2386 = vld [vmem:[%s1935 + $0x4a] sm:$0xff]
      %v2387 = vld [vmem:[%s1935 + $0x52] sm:$0xff]
      %v2388 = vld [vmem:[%s1935 + $0x62] sm:$0xff]
      %v2389 = vld [vmem:[%s1935 + $0x6a] sm:$0xff]
      %v2390 = vld [vmem:[%s1935 + $0x7a] sm:$0xff]
      %v2391 = vld [vmem:[%s1935 + $0x82] sm:$0xff]
      %v2392 = vld [vmem:[%s1935 + $0x92] sm:$0xff]
      %v2393 = vld [vmem:[%s1935 + $0x9a] sm:$0xff]
      %v2394 = vld [vmem:[%s1935 + $0xaa] sm:$0xff]
      %v2395 = vld [vmem:[%s1935 + $0xb2] sm:$0xff]
      %v2396 = vld [vmem:[%s1935 + $0xc2] sm:$0xff]
      %v2397 = vld [vmem:[%s1935 + $0xca] sm:$0xff]
      %v2398 = vld [vmem:[%s1935 + $0xda] sm:$0xff]
      %v2399 = vld [vmem:[%s1935 + $0xe2] sm:$0xff]
      %v2400 = vld [vmem:[%s1935 + $0xf2] sm:$0xff]
      %v2401 = vld [vmem:[%s1935 + $0xfa] sm:$0xff]
      %v2402 = vld [vmem:[%s1935 + $0x10a] sm:$0xff]
      %v2403 = vld [vmem:[%s1935 + $0x112] sm:$0xff]
      %v2404 = vld [vmem:[%s1935 + $0x122] sm:$0xff]
      %v2405 = vld [vmem:[%s1935 + $0x12a] sm:$0xff]
      %v2406 = vld [vmem:[%s1935 + $0x13a] sm:$0xff]
      %v2407 = vld [vmem:[%s1935 + $0x142] sm:$0xff]
      %v2408 = vld [vmem:[%s1935 + $0x152] sm:$0xff]
      %v2409 = vld [vmem:[%s1935 + $0x15a] sm:$0xff]
      %v2410 = vld [vmem:[%s1935 + $0x16a] sm:$0xff]
      %v2411 = vld [vmem:[%s1935 + $0x172] sm:$0xff]
      %v2412 = vpack.c.bf16 %v2381, %v2380
      %v2413 = vpack.c.bf16 %v2383, %v2382
      %v2414 = vpack.c.bf16 %v2385, %v2384
      %v2415 = vpack.c.bf16 %v2387, %v2386
      %v2416 = vpack.c.bf16 %v2389, %v2388
      %v2417 = vpack.c.bf16 %v2391, %v2390
      %v2418 = vpack.c.bf16 %v2393, %v2392
      %v2419 = vpack.c.bf16 %v2395, %v2394
      %v2420 = vpack.c.bf16 %v2397, %v2396
      %v2421 = vpack.c.bf16 %v2399, %v2398
      %v2422 = vpack.c.bf16 %v2401, %v2400
      %v2423 = vpack.c.bf16 %v2403, %v2402
      %v2424 = vpack.c.bf16 %v2405, %v2404
      %v2425 = vpack.c.bf16 %v2407, %v2406
      %v2426 = vpack.c.bf16 %v2409, %v2408
      %v2427 = vpack.c.bf16 %v2411, %v2410
      %s2428 = scalar_lea.vmem %s3, 16
      %v2429 = vld [vmem:[%s2428] sm:$0x3]
      %v2431 = vsel %vm510, %v2412, 0
      %v2434 = vsel %vm510, %v2413, 0
      %v2437 = vsel %vm510, %v2414, 0
      %v2440 = vsel %vm510, %v2415, 0
      %v2443 = vsel %vm510, %v2416, 0
      %v2446 = vsel %vm510, %v2417, 0
      %v2449 = vsel %vm510, %v2418, 0
      %v2452 = vsel %vm510, %v2419, 0
      %v2455 = vsel %vm510, %v2420, 0
      %v2458 = vsel %vm510, %v2421, 0
      %v2461 = vsel %vm510, %v2422, 0
      %v2464 = vsel %vm510, %v2423, 0
      %v2467 = vsel %vm510, %v2424, 0
      %v2470 = vsel %vm510, %v2425, 0
      %v2473 = vsel %vm510, %v2426, 0
      %v2476 = vsel %vm510, %v2427, 0
      %v2479 = vsel %vm700, %v2429, 0
      %2481 = vmatpush.bf16.msra.mxu0 0
      %2482 = vmatpush.bf16.msra.mxu0 0
      %2483 = vmatpush.bf16.msra.mxu0 0
      %2484 = vmatpush.bf16.msra.mxu0 0
      %2485 = vmatpush.bf16.msra.mxu0 0
      %2486 = vmatpush.bf16.msra.mxu0 0
      %2487 = vmatpush.bf16.msra.mxu0 0
      %2488 = vmatpush.bf16.msra.mxu0 %v2479
      %2489 = vmatmul.bf16.gmra.mxu0 %v2431
      %v2490 = vpop.f32.mrf.mxu0
      %v2491 = vadd.f32 0.0, %v2490
      %v2492 = vpop.f32.mrf.mxu0
      %v2493 = vadd.f32 0.0, %v2492
      %2494 = vmatmul.bf16.gmra.mxu0 %v2434
      %v2495 = vpop.f32.mrf.mxu0
      %v2496 = vadd.f32 0.0, %v2495
      %v2497 = vpop.f32.mrf.mxu0
      %v2498 = vadd.f32 0.0, %v2497
      %2499 = vmatmul.bf16.gmra.mxu0 %v2437
      %v2500 = vpop.f32.mrf.mxu0
      %v2501 = vadd.f32 0.0, %v2500
      %v2502 = vpop.f32.mrf.mxu0
      %v2503 = vadd.f32 0.0, %v2502
      %2504 = vmatmul.bf16.gmra.mxu0 %v2440
      %v2505 = vpop.f32.mrf.mxu0
      %v2506 = vadd.f32 0.0, %v2505
      %v2507 = vpop.f32.mrf.mxu0
      %v2508 = vadd.f32 0.0, %v2507
      %2509 = vmatmul.bf16.gmra.mxu0 %v2443
      %v2510 = vpop.f32.mrf.mxu0
      %v2511 = vadd.f32 0.0, %v2510
      %v2512 = vpop.f32.mrf.mxu0
      %v2513 = vadd.f32 0.0, %v2512
      %2514 = vmatmul.bf16.gmra.mxu0 %v2446
      %v2515 = vpop.f32.mrf.mxu0
      %v2516 = vadd.f32 0.0, %v2515
      %v2517 = vpop.f32.mrf.mxu0
      %v2518 = vadd.f32 0.0, %v2517
      %2519 = vmatmul.bf16.gmra.mxu0 %v2449
      %v2520 = vpop.f32.mrf.mxu0
      %v2521 = vadd.f32 0.0, %v2520
      %v2522 = vpop.f32.mrf.mxu0
      %v2523 = vadd.f32 0.0, %v2522
      %2524 = vmatmul.bf16.gmra.mxu0 %v2452
      %v2525 = vpop.f32.mrf.mxu0
      %v2526 = vadd.f32 0.0, %v2525
      %v2527 = vpop.f32.mrf.mxu0
      %v2528 = vadd.f32 0.0, %v2527
      %2529 = vmatmul.bf16.gmra.mxu0 %v2455
      %v2530 = vpop.f32.mrf.mxu0
      %v2531 = vadd.f32 0.0, %v2530
      %v2532 = vpop.f32.mrf.mxu0
      %v2533 = vadd.f32 0.0, %v2532
      %2534 = vmatmul.bf16.gmra.mxu0 %v2458
      %v2535 = vpop.f32.mrf.mxu0
      %v2536 = vadd.f32 0.0, %v2535
      %v2537 = vpop.f32.mrf.mxu0
      %v2538 = vadd.f32 0.0, %v2537
      %2539 = vmatmul.bf16.gmra.mxu0 %v2461
      %v2540 = vpop.f32.mrf.mxu0
      %v2541 = vadd.f32 0.0, %v2540
      %v2542 = vpop.f32.mrf.mxu0
      %v2543 = vadd.f32 0.0, %v2542
      %2544 = vmatmul.bf16.gmra.mxu0 %v2464
      %v2545 = vpop.f32.mrf.mxu0
      %v2546 = vadd.f32 0.0, %v2545
      %v2547 = vpop.f32.mrf.mxu0
      %v2548 = vadd.f32 0.0, %v2547
      %2549 = vmatmul.bf16.gmra.mxu0 %v2467
      %v2550 = vpop.f32.mrf.mxu0
      %v2551 = vadd.f32 0.0, %v2550
      %v2552 = vpop.f32.mrf.mxu0
      %v2553 = vadd.f32 0.0, %v2552
      %2554 = vmatmul.bf16.gmra.mxu0 %v2470
      %v2555 = vpop.f32.mrf.mxu0
      %v2556 = vadd.f32 0.0, %v2555
      %v2557 = vpop.f32.mrf.mxu0
      %v2558 = vadd.f32 0.0, %v2557
      %2559 = vmatmul.bf16.gmra.mxu0 %v2473
      %v2560 = vpop.f32.mrf.mxu0
      %v2561 = vadd.f32 0.0, %v2560
      %v2562 = vpop.f32.mrf.mxu0
      %v2563 = vadd.f32 0.0, %v2562
      %2564 = vmatmul.bf16.gmra.mxu0 %v2476
      %v2565 = vpop.f32.mrf.mxu0
      %v2566 = vadd.f32 0.0, %v2565
      %v2567 = vpop.f32.mrf.mxu0
      %v2568 = vadd.f32 0.0, %v2567
      %2569 = vdwg.mxu0
      %v2570 = vadd.f32 %v2348, %v2491
      %v2571 = vadd.f32 %v2349, %v2493
      %v2572 = vadd.f32 %v2350, %v2496
      %v2573 = vadd.f32 %v2351, %v2498
      %v2574 = vadd.f32 %v2352, %v2501
      %v2575 = vadd.f32 %v2353, %v2503
      %v2576 = vadd.f32 %v2354, %v2506
      %v2577 = vadd.f32 %v2355, %v2508
      %v2578 = vadd.f32 %v2356, %v2511
      %v2579 = vadd.f32 %v2357, %v2513
      %v2580 = vadd.f32 %v2358, %v2516
      %v2581 = vadd.f32 %v2359, %v2518
      %v2582 = vadd.f32 %v2360, %v2521
      %v2583 = vadd.f32 %v2361, %v2523
      %v2584 = vadd.f32 %v2362, %v2526
      %v2585 = vadd.f32 %v2363, %v2528
      %v2586 = vadd.f32 %v2364, %v2531
      %v2587 = vadd.f32 %v2365, %v2533
      %v2588 = vadd.f32 %v2366, %v2536
      %v2589 = vadd.f32 %v2367, %v2538
      %v2590 = vadd.f32 %v2368, %v2541
      %v2591 = vadd.f32 %v2369, %v2543
      %v2592 = vadd.f32 %v2370, %v2546
      %v2593 = vadd.f32 %v2371, %v2548
      %v2594 = vadd.f32 %v2372, %v2551
      %v2595 = vadd.f32 %v2373, %v2553
      %v2596 = vadd.f32 %v2374, %v2556
      %v2597 = vadd.f32 %v2375, %v2558
      %v2598 = vadd.f32 %v2376, %v2561
      %v2599 = vadd.f32 %v2377, %v2563
      %v2600 = vadd.f32 %v2378, %v2566
      %v2601 = vadd.f32 %v2379, %v2568
      %v2602 = vmax.f32 %v2570, 0.0
      %v2603 = vmax.f32 %v2571, 0.0
      %v2604 = vmax.f32 %v2572, 0.0
      %v2605 = vmax.f32 %v2573, 0.0
      %v2606 = vmax.f32 %v2574, 0.0
      %v2607 = vmax.f32 %v2575, 0.0
      %v2608 = vmax.f32 %v2576, 0.0
      %v2609 = vmax.f32 %v2577, 0.0
      %v2610 = vmax.f32 %v2578, 0.0
      %v2611 = vmax.f32 %v2579, 0.0
      %v2612 = vmax.f32 %v2580, 0.0
      %v2613 = vmax.f32 %v2581, 0.0
      %v2614 = vmax.f32 %v2582, 0.0
      %v2615 = vmax.f32 %v2583, 0.0
      %v2616 = vmax.f32 %v2584, 0.0
      %v2617 = vmax.f32 %v2585, 0.0
      %v2618 = vmax.f32 %v2586, 0.0
      %v2619 = vmax.f32 %v2587, 0.0
      %v2620 = vmax.f32 %v2588, 0.0
      %v2621 = vmax.f32 %v2589, 0.0
      %v2622 = vmax.f32 %v2590, 0.0
      %v2623 = vmax.f32 %v2591, 0.0
      %v2624 = vmax.f32 %v2592, 0.0
      %v2625 = vmax.f32 %v2593, 0.0
      %v2626 = vmax.f32 %v2594, 0.0
      %v2627 = vmax.f32 %v2595, 0.0
      %v2628 = vmax.f32 %v2596, 0.0
      %v2629 = vmax.f32 %v2597, 0.0
      %v2630 = vmax.f32 %v2598, 0.0
      %v2631 = vmax.f32 %v2599, 0.0
      %v2632 = vmax.f32 %v2600, 0.0
      %v2633 = vmax.f32 %v2601, 0.0
      %v2634 = vpack.c.bf16 %v2603, %v2602
      %v2635 = vpack.c.bf16 %v2605, %v2604
      %v2636 = vpack.c.bf16 %v2607, %v2606
      %v2637 = vpack.c.bf16 %v2609, %v2608
      %v2638 = vpack.c.bf16 %v2611, %v2610
      %v2639 = vpack.c.bf16 %v2613, %v2612
      %v2640 = vpack.c.bf16 %v2615, %v2614
      %v2641 = vpack.c.bf16 %v2617, %v2616
      %v2642 = vpack.c.bf16 %v2619, %v2618
      %v2643 = vpack.c.bf16 %v2621, %v2620
      %v2644 = vpack.c.bf16 %v2623, %v2622
      %v2645 = vpack.c.bf16 %v2625, %v2624
      %v2646 = vpack.c.bf16 %v2627, %v2626
      %v2647 = vpack.c.bf16 %v2629, %v2628
      %v2648 = vpack.c.bf16 %v2631, %v2630
      %v2649 = vpack.c.bf16 %v2633, %v2632
      %v2650 = vld [vmem:[%s5] sm:$0x3]
      %v2651 = vld [vmem:[%s6] sm:$0x1]
      %v2653 = vperm.slane %v2651, 0
      %v2655 = vadd.f32 %v280, %v2653
      %v2656 = vadd.f32 %v281, %v2653
      %v2657 = vadd.f32 %v282, %v2653
      %v2658 = vadd.f32 %v283, %v2653
      %v2659 = vadd.f32 %v284, %v2653
      %v2660 = vadd.f32 %v285, %v2653
      %v2661 = vadd.f32 %v286, %v2653
      %v2662 = vadd.f32 %v287, %v2653
      %v2663 = vadd.f32 %v288, %v2653
      %v2664 = vadd.f32 %v289, %v2653
      %v2665 = vadd.f32 %v290, %v2653
      %v2666 = vadd.f32 %v291, %v2653
      %v2667 = vadd.f32 %v292, %v2653
      %v2668 = vadd.f32 %v293, %v2653
      %v2669 = vadd.f32 %v294, %v2653
      %v2670 = vadd.f32 %v295, %v2653
      %v2671 = vadd.f32 %v296, %v2653
      %v2672 = vadd.f32 %v297, %v2653
      %v2673 = vadd.f32 %v298, %v2653
      %v2674 = vadd.f32 %v299, %v2653
      %v2675 = vadd.f32 %v300, %v2653
      %v2676 = vadd.f32 %v301, %v2653
      %v2677 = vadd.f32 %v302, %v2653
      %v2678 = vadd.f32 %v303, %v2653
      %v2679 = vadd.f32 %v304, %v2653
      %v2680 = vadd.f32 %v305, %v2653
      %v2681 = vadd.f32 %v306, %v2653
      %v2682 = vadd.f32 %v307, %v2653
      %v2683 = vadd.f32 %v308, %v2653
      %v2684 = vadd.f32 %v309, %v2653
      %v2685 = vadd.f32 %v310, %v2653
      %v2686 = vadd.f32 %v311, %v2653
      %v2688 = vsel %vm510, %v2634, 0
      %v2691 = vsel %vm510, %v2635, 0
      %v2694 = vsel %vm510, %v2636, 0
      %v2697 = vsel %vm510, %v2637, 0
      %v2700 = vsel %vm510, %v2638, 0
      %v2703 = vsel %vm510, %v2639, 0
      %v2706 = vsel %vm510, %v2640, 0
      %v2709 = vsel %vm510, %v2641, 0
      %v2712 = vsel %vm510, %v2642, 0
      %v2715 = vsel %vm510, %v2643, 0
      %v2718 = vsel %vm510, %v2644, 0
      %v2721 = vsel %vm510, %v2645, 0
      %v2724 = vsel %vm510, %v2646, 0
      %v2727 = vsel %vm510, %v2647, 0
      %v2730 = vsel %vm510, %v2648, 0
      %v2733 = vsel %vm510, %v2649, 0
      %v2736 = vsel %vm700, %v2650, 0
      %2738 = vmatpush.bf16.msra.mxu0 0
      %2739 = vmatpush.bf16.msra.mxu0 0
      %2740 = vmatpush.bf16.msra.mxu0 0
      %2741 = vmatpush.bf16.msra.mxu0 0
      %2742 = vmatpush.bf16.msra.mxu0 0
      %2743 = vmatpush.bf16.msra.mxu0 0
      %2744 = vmatpush.bf16.msra.mxu0 0
      %2745 = vmatpush.bf16.msra.mxu0 %v2736
      %2746 = vmatmul.bf16.gmra.mxu0 %v2688
      %v2747 = vpop.f32.mrf.mxu0
      %v2748 = vadd.f32 %v2655, %v2747
      %v2749 = vpop.f32.mrf.mxu0
      %v2750 = vadd.f32 %v2656, %v2749
      %2751 = vmatmul.bf16.gmra.mxu0 %v2691
      %v2752 = vpop.f32.mrf.mxu0
      %v2753 = vadd.f32 %v2657, %v2752
      %v2754 = vpop.f32.mrf.mxu0
      %v2755 = vadd.f32 %v2658, %v2754
      %2756 = vmatmul.bf16.gmra.mxu0 %v2694
      %v2757 = vpop.f32.mrf.mxu0
      %v2758 = vadd.f32 %v2659, %v2757
      %v2759 = vpop.f32.mrf.mxu0
      %v2760 = vadd.f32 %v2660, %v2759
      %2761 = vmatmul.bf16.gmra.mxu0 %v2697
      %v2762 = vpop.f32.mrf.mxu0
      %v2763 = vadd.f32 %v2661, %v2762
      %v2764 = vpop.f32.mrf.mxu0
      %v2765 = vadd.f32 %v2662, %v2764
      %2766 = vmatmul.bf16.gmra.mxu0 %v2700
      %v2767 = vpop.f32.mrf.mxu0
      %v2768 = vadd.f32 %v2663, %v2767
      %v2769 = vpop.f32.mrf.mxu0
      %v2770 = vadd.f32 %v2664, %v2769
      %2771 = vmatmul.bf16.gmra.mxu0 %v2703
      %v2772 = vpop.f32.mrf.mxu0
      %v2773 = vadd.f32 %v2665, %v2772
      %v2774 = vpop.f32.mrf.mxu0
      %v2775 = vadd.f32 %v2666, %v2774
      %2776 = vmatmul.bf16.gmra.mxu0 %v2706
      %v2777 = vpop.f32.mrf.mxu0
      %v2778 = vadd.f32 %v2667, %v2777
      %v2779 = vpop.f32.mrf.mxu0
      %v2780 = vadd.f32 %v2668, %v2779
      %2781 = vmatmul.bf16.gmra.mxu0 %v2709
      %v2782 = vpop.f32.mrf.mxu0
      %v2783 = vadd.f32 %v2669, %v2782
      %v2784 = vpop.f32.mrf.mxu0
      %v2785 = vadd.f32 %v2670, %v2784
      %2786 = vmatmul.bf16.gmra.mxu0 %v2712
      %v2787 = vpop.f32.mrf.mxu0
      %v2788 = vadd.f32 %v2671, %v2787
      %v2789 = vpop.f32.mrf.mxu0
      %v2790 = vadd.f32 %v2672, %v2789
      %2791 = vmatmul.bf16.gmra.mxu0 %v2715
      %v2792 = vpop.f32.mrf.mxu0
      %v2793 = vadd.f32 %v2673, %v2792
      %v2794 = vpop.f32.mrf.mxu0
      %v2795 = vadd.f32 %v2674, %v2794
      %2796 = vmatmul.bf16.gmra.mxu0 %v2718
      %v2797 = vpop.f32.mrf.mxu0
      %v2798 = vadd.f32 %v2675, %v2797
      %v2799 = vpop.f32.mrf.mxu0
      %v2800 = vadd.f32 %v2676, %v2799
      %2801 = vmatmul.bf16.gmra.mxu0 %v2721
      %v2802 = vpop.f32.mrf.mxu0
      %v2803 = vadd.f32 %v2677, %v2802
      %v2804 = vpop.f32.mrf.mxu0
      %v2805 = vadd.f32 %v2678, %v2804
      %2806 = vmatmul.bf16.gmra.mxu0 %v2724
      %v2807 = vpop.f32.mrf.mxu0
      %v2808 = vadd.f32 %v2679, %v2807
      %v2809 = vpop.f32.mrf.mxu0
      %v2810 = vadd.f32 %v2680, %v2809
      %2811 = vmatmul.bf16.gmra.mxu0 %v2727
      %v2812 = vpop.f32.mrf.mxu0
      %v2813 = vadd.f32 %v2681, %v2812
      %v2814 = vpop.f32.mrf.mxu0
      %v2815 = vadd.f32 %v2682, %v2814
      %2816 = vmatmul.bf16.gmra.mxu0 %v2730
      %v2817 = vpop.f32.mrf.mxu0
      %v2818 = vadd.f32 %v2683, %v2817
      %v2819 = vpop.f32.mrf.mxu0
      %v2820 = vadd.f32 %v2684, %v2819
      %2821 = vmatmul.bf16.gmra.mxu0 %v2733
      %v2822 = vpop.f32.mrf.mxu0
      %v2823 = vadd.f32 %v2685, %v2822
      %v2824 = vpop.f32.mrf.mxu0
      %v2825 = vadd.f32 %v2686, %v2824
      %2826 = vdwg.mxu0
      %v2827 = vmax.f32 %v2748, 0.0
      %v2828 = vmax.f32 %v2750, 0.0
      %v2829 = vmax.f32 %v2753, 0.0
      %v2830 = vmax.f32 %v2755, 0.0
      %v2831 = vmax.f32 %v2758, 0.0
      %v2832 = vmax.f32 %v2760, 0.0
      %v2833 = vmax.f32 %v2763, 0.0
      %v2834 = vmax.f32 %v2765, 0.0
      %v2835 = vmax.f32 %v2768, 0.0
      %v2836 = vmax.f32 %v2770, 0.0
      %v2837 = vmax.f32 %v2773, 0.0
      %v2838 = vmax.f32 %v2775, 0.0
      %v2839 = vmax.f32 %v2778, 0.0
      %v2840 = vmax.f32 %v2780, 0.0
      %v2841 = vmax.f32 %v2783, 0.0
      %v2842 = vmax.f32 %v2785, 0.0
      %v2843 = vmax.f32 %v2788, 0.0
      %v2844 = vmax.f32 %v2790, 0.0
      %v2845 = vmax.f32 %v2793, 0.0
      %v2846 = vmax.f32 %v2795, 0.0
      %v2847 = vmax.f32 %v2798, 0.0
      %v2848 = vmax.f32 %v2800, 0.0
      %v2849 = vmax.f32 %v2803, 0.0
      %v2850 = vmax.f32 %v2805, 0.0
      %v2851 = vmax.f32 %v2808, 0.0
      %v2852 = vmax.f32 %v2810, 0.0
      %v2853 = vmax.f32 %v2813, 0.0
      %v2854 = vmax.f32 %v2815, 0.0
      %v2855 = vmax.f32 %v2818, 0.0
      %v2856 = vmax.f32 %v2820, 0.0
      %v2857 = vmax.f32 %v2823, 0.0
      %v2858 = vmax.f32 %v2825, 0.0
      %2859 = vst.msk [vmem:[%s278] sm:$0xff] %vm340, %v2827
      %2860 = vst.msk [vmem:[%s278 + $0x8] sm:$0xff] %vm340, %v2828
      %2861 = vst.msk [vmem:[%s278 + $0x10] sm:$0xff] %vm340, %v2829
      %2862 = vst.msk [vmem:[%s278 + $0x18] sm:$0xff] %vm340, %v2830
      %2863 = vst.msk [vmem:[%s278 + $0x20] sm:$0xff] %vm340, %v2831
      %2864 = vst.msk [vmem:[%s278 + $0x28] sm:$0xff] %vm340, %v2832
      %2865 = vst.msk [vmem:[%s278 + $0x30] sm:$0xff] %vm340, %v2833
      %2866 = vst.msk [vmem:[%s278 + $0x38] sm:$0xff] %vm340, %v2834
      %2867 = vst.msk [vmem:[%s278 + $0x40] sm:$0xff] %vm340, %v2835
      %2868 = vst.msk [vmem:[%s278 + $0x48] sm:$0xff] %vm340, %v2836
      %2869 = vst.msk [vmem:[%s278 + $0x50] sm:$0xff] %vm340, %v2837
      %2870 = vst.msk [vmem:[%s278 + $0x58] sm:$0xff] %vm340, %v2838
      %2871 = vst.msk [vmem:[%s278 + $0x60] sm:$0xff] %vm340, %v2839
      %2872 = vst.msk [vmem:[%s278 + $0x68] sm:$0xff] %vm340, %v2840
      %2873 = vst.msk [vmem:[%s278 + $0x70] sm:$0xff] %vm340, %v2841
      %2874 = vst.msk [vmem:[%s278 + $0x78] sm:$0xff] %vm340, %v2842
      %2875 = vst.msk [vmem:[%s278 + $0x80] sm:$0xff] %vm340, %v2843
      %2876 = vst.msk [vmem:[%s278 + $0x88] sm:$0xff] %vm340, %v2844
      %2877 = vst.msk [vmem:[%s278 + $0x90] sm:$0xff] %vm340, %v2845
      %2878 = vst.msk [vmem:[%s278 + $0x98] sm:$0xff] %vm340, %v2846
      %2879 = vst.msk [vmem:[%s278 + $0xa0] sm:$0xff] %vm340, %v2847
      %2880 = vst.msk [vmem:[%s278 + $0xa8] sm:$0xff] %vm340, %v2848
      %2881 = vst.msk [vmem:[%s278 + $0xb0] sm:$0xff] %vm340, %v2849
      %2882 = vst.msk [vmem:[%s278 + $0xb8] sm:$0xff] %vm340, %v2850
      %2883 = vst.msk [vmem:[%s278 + $0xc0] sm:$0xff] %vm340, %v2851
      %2884 = vst.msk [vmem:[%s278 + $0xc8] sm:$0xff] %vm340, %v2852
      %2885 = vst.msk [vmem:[%s278 + $0xd0] sm:$0xff] %vm340, %v2853
      %2886 = vst.msk [vmem:[%s278 + $0xd8] sm:$0xff] %vm340, %v2854
      %2887 = vst.msk [vmem:[%s278 + $0xe0] sm:$0xff] %vm340, %v2855
      %2888 = vst.msk [vmem:[%s278 + $0xe8] sm:$0xff] %vm340, %v2856
      %2889 = vst.msk [vmem:[%s278 + $0xf0] sm:$0xff] %vm340, %v2857
      %2890 = vst.msk [vmem:[%s278 + $0xf8] sm:$0xff] %vm340, %v2858
      %p2891 = scmp.lt.s32.totalorder %s18, 1
      %s2892 = scalar_select %p2891, %s18, 1
      %s2893 = smul.addr %s2892, 32
      %s2894 = smul.addr %s2893, 8
      %s2895 = scalar_lea.vmem %s7, %s2894
      // Predicated region
      $region49: #{bottleneck_forward.1} parent=47 // pred_check
        %p2896 = pneg %p188
      $region50: #{bottleneck_forward.1} parent=47 // pred_check_branch
        %2898 = sbr.rel (%p2896) target = $region52
      $region51: #{bottleneck_forward.1} parent=47 // pred_region
        _
      $region52: #{bottleneck_forward.1} parent=47 // pred_fallthru
        _
    $region48: #{bottleneck_forward.1} parent=5 // pred_fallthru
      _
    %p2899 = scmp.le.s32.totalorder 2, %s13
    // Predicated region
    $region53: #{bottleneck_forward.1} parent=5 // pred_check
      %p2900 = pneg %p2899
    $region54: #{bottleneck_forward.1} parent=5 // pred_check_branch
      %2902 = sbr.rel (%p2900) target = $region56
    $region55: #{bottleneck_forward.1} parent=5 // pred_region
      %s2903 = ssub.s32 %s13, 2
      // Predicated region
      $region57: #{bottleneck_forward.1} parent=55 // pred_check
        %p2904 = pneg %p194
      $region58: #{bottleneck_forward.1} parent=55 // pred_check_branch
        %2906 = sbr.rel (%p2904) target = $region60
      $region59: #{bottleneck_forward.1} parent=55 // pred_region
        %p2907 = scmp.lt.s32.totalorder %s19, 1
        %s2908 = scalar_select %p2907, %s19, 1
        %s2909 = smul.addr %s2908, 32
        %s2910 = smul.addr %s2909, 8
        %s2911 = scalar_lea.vmem %s7, %s2910
      $region60: #{bottleneck_forward.1} parent=55 // pred_fallthru
        _
    $region56: #{bottleneck_forward.1} parent=5 // pred_fallthru
      _
  $region6: #{bottleneck_forward.1} parent=0 // loop_footer
    %s17 = sadd.s32 1, %s13
  $region7: #{bottleneck_forward.1} parent=0 // loop_footer_branch
    %12 = sbr.rel target = $region3
  $region8: #{bottleneck_forward.1} parent=0 // loop_exit
    _

</llo_original>
